<compile_context>
chip_gen: v6e
topology: v6e:2x2x1
jax: 0.10.0
libtpu: 0.0.40
codegen_flags: <defaults>
</compile_context>

<pallas_src>
import math
import functools

import jax
import jax.numpy as jnp
from jax.experimental import pallas as pl
from jax.experimental.pallas import tpu as pltpu


def _mha_kernel(q_ref, k_ref, v_ref,
                wq_ref, bq_ref, wk_ref, bk_ref,
                wv_ref, bv_ref, wo_ref, bo_ref,
                o_ref, *, num_heads: int, dim_per_head: int):
    Bt, L, C = q_ref.shape
    M = Bt * L
    dh = dim_per_head
    scale = 1.0 / math.sqrt(float(dh))

    # Flatten the batch block so the projections run with M = Bt*L rows.
    q = q_ref[...].reshape(M, C)
    k = k_ref[...].reshape(M, C)
    v = v_ref[...].reshape(M, C)

    # Projections: weights are pre-transposed in the wrapper -> x @ W + b.
    # The 1/sqrt(dh) scale is folded into Q (one (M, C) multiply).
    Q = (jnp.dot(q, wq_ref[...], preferred_element_type=jnp.float32)
         + bq_ref[...]) * scale
    K = jnp.dot(k, wk_ref[...], preferred_element_type=jnp.float32) + bk_ref[...]
    V = jnp.dot(v, wv_ref[...], preferred_element_type=jnp.float32) + bv_ref[...]

    Q3 = Q.reshape(Bt, L, C)
    K3 = K.reshape(Bt, L, C)
    V3 = V.reshape(Bt, L, C)

    # Per-head batched scores (H is small and static), stacked along a leading
    # head axis so the head-axis softmax is a single axis reduction.
    scores = []
    for h in range(num_heads):
        lo = h * dh
        Qh = Q3[:, :, lo:lo + dh]            # (Bt, L, dh)
        Kh = K3[:, :, lo:lo + dh]            # (Bt, L, dh)
        scores.append(jnp.einsum('bld,bmd->blm', Qh, Kh,
                                 preferred_element_type=jnp.float32))
    S = jnp.stack(scores, axis=0)            # (H, Bt, L, L)

    # Softmax over the HEAD axis (reproduces nn.Softmax(dim=1) on (B, H, L, L)).
    m = jnp.max(S, axis=0)                   # (Bt, L, L)
    E = jnp.exp(S - m)                       # (H, Bt, L, L)
    denom = jnp.sum(E, axis=0)               # (Bt, L, L)
    inv = pl.reciprocal(denom)               # one reciprocal instead of H divides
    A = E * inv                              # (H, Bt, L, L)

    # Output projection decomposed per head: no lane-axis concatenate.
    acc = jnp.zeros((M, C), jnp.float32)
    for h in range(num_heads):
        lo = h * dh
        Vh = V3[:, :, lo:lo + dh]                                # (Bt, L, dh)
        Zh = jnp.einsum('blm,bmd->bld', A[h], Vh,
                        preferred_element_type=jnp.float32)      # (Bt, L, dh)
        acc = acc + jnp.dot(Zh.reshape(M, dh), wo_ref[lo:lo + dh, :],
                            preferred_element_type=jnp.float32)
    out = acc + bo_ref[...]

    o_ref[...] = out.reshape(Bt, L, C).astype(o_ref.dtype)

    # TODO(synk): optional attention `mask` argument not implemented (forward
    # default is mask=None).


def multi_head_attention(query, key, value, params, *, num_heads: int,
                         batch_block: int | None = None):
    B, L, C = query.shape
    assert C % num_heads == 0
    dh = C // num_heads

    wq, bq, wk, bk, wv, bv, wo, bo = params

    # Pre-transpose the weights once outside the kernel (store as (in, out))
    # so the kernel does x @ W with no in-kernel transposes.
    wq_t, wk_t, wv_t, wo_t = wq.T, wk.T, wv.T, wo.T
    bq = bq.reshape(1, C)
    bk = bk.reshape(1, C)
    bv = bv.reshape(1, C)
    bo = bo.reshape(1, C)

    # Block several batch elements per grid step (target >= ~512 rows per step),
    # picking a divisor of B so every block is full.
    if batch_block is None:
        target = max(1, 512 // max(L, 1))
        batch_block = 1
        for cand in range(min(B, target), 0, -1):
            if B % cand == 0:
                batch_block = cand
                break
    Bt = batch_block
    assert B % Bt == 0
    grid = (B // Bt,)

    kernel = functools.partial(_mha_kernel, num_heads=num_heads, dim_per_head=dh)

    x_spec = pl.BlockSpec((Bt, L, C), lambda b: (b, 0, 0))
    w_spec = pl.BlockSpec((C, C), lambda b: (0, 0))   # resident across the grid
    b_spec = pl.BlockSpec((1, C), lambda b: (0, 0))

    return pl.pallas_call(
        kernel,
        out_shape=jax.ShapeDtypeStruct((B, L, C), query.dtype),
        grid=grid,
        in_specs=[x_spec, x_spec, x_spec,
                  w_spec, b_spec, w_spec, b_spec,
                  w_spec, b_spec, w_spec, b_spec],
        out_specs=x_spec,
        compiler_params=pltpu.CompilerParams(
            dimension_semantics=("parallel",)),
    )(query, key, value, wq_t, bq, wk_t, bk, wv_t, bv, wo_t, bo)


def reference_mha(query, key, value, params, *, num_heads: int):
    """Pure-JAX transcription of the PyTorch forward (incl. softmax over dim=1)."""
    B, L, C = query.shape
    dh = C // num_heads
    wq, bq, wk, bk, wv, bv, wo, bo = params
    Q = query @ wq.T + bq
    K = key @ wk.T + bk
    V = value @ wv.T + bv
    Q = Q.reshape(B, L, num_heads, dh).transpose(0, 2, 1, 3)
    K = K.reshape(B, L, num_heads, dh).transpose(0, 2, 1, 3)
    V = V.reshape(B, L, num_heads, dh).transpose(0, 2, 1, 3)
    scores = jnp.matmul(Q, jnp.swapaxes(K, -2, -1)) / jnp.sqrt(jnp.float32(dh))
    A = jax.nn.softmax(scores, axis=1)            # head axis, as in the module
    Z = jnp.matmul(A, V)                          # (B, H, L, dh)
    Z = Z.transpose(0, 2, 1, 3).reshape(B, L, C)
    return Z @ wo.T + bo


if __name__ == "__main__":
    B, L, C, H = 2, 8, 32, 4

    key = jax.random.PRNGKey(0)
    ks = jax.random.split(key, 11)
    scale = 1.0 / math.sqrt(C)
    # Deterministic synthetic parameters (PyTorch Linear weight shape: (out, in)).
    wq = jax.random.uniform(ks[0], (C, C), jnp.float32, -scale, scale)
    bq = jax.random.uniform(ks[1], (C,), jnp.float32, -scale, scale)
    wk = jax.random.uniform(ks[2], (C, C), jnp.float32, -scale, scale)
    bk = jax.random.uniform(ks[3], (C,), jnp.float32, -scale, scale)
    wv = jax.random.uniform(ks[4], (C, C), jnp.float32, -scale, scale)
    bv = jax.random.uniform(ks[5], (C,), jnp.float32, -scale, scale)
    wo = jax.random.uniform(ks[6], (C, C), jnp.float32, -scale, scale)
    bo = jax.random.uniform(ks[7], (C,), jnp.float32, -scale, scale)
    params = (wq, bq, wk, bk, wv, bv, wo, bo)

    query = jax.random.normal(ks[8], (B, L, C), jnp.float32)
    key_t = jax.random.normal(ks[9], (B, L, C), jnp.float32)
    value = jax.random.normal(ks[10], (B, L, C), jnp.float32)

    out = multi_head_attention(query, key_t, value, params, num_heads=H)
    out = jax.block_until_ready(out)

    ref = reference_mha(query, key_t, value, params, num_heads=H)
    assert out.shape == (B, L, C)
    assert jnp.allclose(out, ref, atol=1e-4, rtol=1e-4), "mismatch vs reference"

    print("KERNEL_OK")
</pallas_src>

<mosaic_0001>
module attributes {stable_mosaic.version = 11 : i64} {
  func.func @_mha_kernel(%arg0: i32, %arg1: memref<2x8x32xf32, #tpu.memory_space<vmem>>, %arg2: memref<2x8x32xf32, #tpu.memory_space<vmem>>, %arg3: memref<2x8x32xf32, #tpu.memory_space<vmem>>, %arg4: memref<32x32xf32, #tpu.memory_space<vmem>>, %arg5: memref<1x32xf32, #tpu.memory_space<vmem>>, %arg6: memref<32x32xf32, #tpu.memory_space<vmem>>, %arg7: memref<1x32xf32, #tpu.memory_space<vmem>>, %arg8: memref<32x32xf32, #tpu.memory_space<vmem>>, %arg9: memref<1x32xf32, #tpu.memory_space<vmem>>, %arg10: memref<32x32xf32, #tpu.memory_space<vmem>>, %arg11: memref<1x32xf32, #tpu.memory_space<vmem>>, %arg12: memref<2x8x32xf32, #tpu.memory_space<vmem>>) attributes {dimension_semantics = [#tpu.dimension_semantics<parallel>], iteration_bounds = array<i64: 1>, scalar_prefetch = 0 : i64, scratch_operands = 0 : i64, tpu.core_type = #tpu.core_type<tc>, window_params = [{transform_indices = @transform_0, window_bounds = array<i64: 2, 8, 32>}, {transform_indices = @transform_1, window_bounds = array<i64: 2, 8, 32>}, {transform_indices = @transform_2, window_bounds = array<i64: 2, 8, 32>}, {pipeline_mode = #tpu.pipeline_mode<synchronous>, transform_indices = @transform_3, window_bounds = array<i64: 32, 32>}, {pipeline_mode = #tpu.pipeline_mode<synchronous>, transform_indices = @transform_4, window_bounds = array<i64: 1, 32>}, {pipeline_mode = #tpu.pipeline_mode<synchronous>, transform_indices = @transform_5, window_bounds = array<i64: 32, 32>}, {pipeline_mode = #tpu.pipeline_mode<synchronous>, transform_indices = @transform_6, window_bounds = array<i64: 1, 32>}, {pipeline_mode = #tpu.pipeline_mode<synchronous>, transform_indices = @transform_7, window_bounds = array<i64: 32, 32>}, {pipeline_mode = #tpu.pipeline_mode<synchronous>, transform_indices = @transform_8, window_bounds = array<i64: 1, 32>}, {pipeline_mode = #tpu.pipeline_mode<synchronous>, transform_indices = @transform_9, window_bounds = array<i64: 32, 32>}, {pipeline_mode = #tpu.pipeline_mode<synchronous>, transform_indices = @transform_10, window_bounds = array<i64: 1, 32>}, {transform_indices = @transform_11, window_bounds = array<i64: 2, 8, 32>}]} {
    %c0 = arith.constant 0 : index
    %c0_0 = arith.constant 0 : index
    %c0_1 = arith.constant 0 : index
    %0 = vector.load %arg1[%c0, %c0_0, %c0_1] : memref<2x8x32xf32, #tpu.memory_space<vmem>>, vector<2x8x32xf32>
    %1 = vector.shape_cast %0 : vector<2x8x32xf32> to vector<16x32xf32>
    %c0_2 = arith.constant 0 : index
    %c0_3 = arith.constant 0 : index
    %c0_4 = arith.constant 0 : index
    %2 = vector.load %arg2[%c0_2, %c0_3, %c0_4] : memref<2x8x32xf32, #tpu.memory_space<vmem>>, vector<2x8x32xf32>
    %3 = vector.shape_cast %2 : vector<2x8x32xf32> to vector<16x32xf32>
    %c0_5 = arith.constant 0 : index
    %c0_6 = arith.constant 0 : index
    %c0_7 = arith.constant 0 : index
    %4 = vector.load %arg3[%c0_5, %c0_6, %c0_7] : memref<2x8x32xf32, #tpu.memory_space<vmem>>, vector<2x8x32xf32>
    %5 = vector.shape_cast %4 : vector<2x8x32xf32> to vector<16x32xf32>
    %c0_8 = arith.constant 0 : index
    %c0_9 = arith.constant 0 : index
    %6 = vector.load %arg4[%c0_8, %c0_9] : memref<32x32xf32, #tpu.memory_space<vmem>>, vector<32x32xf32>
    %cst = arith.constant dense<0.000000e+00> : vector<16x32xf32>
    %7 = tpu.matmul %1, %6, %cst {dimension_numbers = #tpu.dot_dimension_numbers<[1], [0], [0], [1], [0, 0, 1, 1], [], []>} : vector<16x32xf32>, vector<32x32xf32>, vector<16x32xf32> -> vector<16x32xf32>
    %c0_10 = arith.constant 0 : index
    %c0_11 = arith.constant 0 : index
    %8 = vector.load %arg5[%c0_10, %c0_11] : memref<1x32xf32, #tpu.memory_space<vmem>>, vector<1x32xf32>
    %9 = vector.broadcast %8 : vector<1x32xf32> to vector<16x32xf32>
    %10 = arith.addf %7, %9 : vector<16x32xf32>
    %cst_12 = arith.constant 0.353553385 : f32
    %11 = vector.broadcast %cst_12 : f32 to vector<16x32xf32>
    %12 = arith.mulf %10, %11 : vector<16x32xf32>
    %c0_13 = arith.constant 0 : index
    %c0_14 = arith.constant 0 : index
    %13 = vector.load %arg6[%c0_13, %c0_14] : memref<32x32xf32, #tpu.memory_space<vmem>>, vector<32x32xf32>
    %cst_15 = arith.constant dense<0.000000e+00> : vector<16x32xf32>
    %14 = tpu.matmul %3, %13, %cst_15 {dimension_numbers = #tpu.dot_dimension_numbers<[1], [0], [0], [1], [0, 0, 1, 1], [], []>} : vector<16x32xf32>, vector<32x32xf32>, vector<16x32xf32> -> vector<16x32xf32>
    %c0_16 = arith.constant 0 : index
    %c0_17 = arith.constant 0 : index
    %15 = vector.load %arg7[%c0_16, %c0_17] : memref<1x32xf32, #tpu.memory_space<vmem>>, vector<1x32xf32>
    %16 = vector.broadcast %15 : vector<1x32xf32> to vector<16x32xf32>
    %17 = arith.addf %14, %16 : vector<16x32xf32>
    %c0_18 = arith.constant 0 : index
    %c0_19 = arith.constant 0 : index
    %18 = vector.load %arg8[%c0_18, %c0_19] : memref<32x32xf32, #tpu.memory_space<vmem>>, vector<32x32xf32>
    %cst_20 = arith.constant dense<0.000000e+00> : vector<16x32xf32>
    %19 = tpu.matmul %5, %18, %cst_20 {dimension_numbers = #tpu.dot_dimension_numbers<[1], [0], [0], [1], [0, 0, 1, 1], [], []>} : vector<16x32xf32>, vector<32x32xf32>, vector<16x32xf32> -> vector<16x32xf32>
    %c0_21 = arith.constant 0 : index
    %c0_22 = arith.constant 0 : index
    %20 = vector.load %arg9[%c0_21, %c0_22] : memref<1x32xf32, #tpu.memory_space<vmem>>, vector<1x32xf32>
    %21 = vector.broadcast %20 : vector<1x32xf32> to vector<16x32xf32>
    %22 = arith.addf %19, %21 : vector<16x32xf32>
    %23 = vector.shape_cast %12 : vector<16x32xf32> to vector<2x8x32xf32>
    %24 = vector.shape_cast %17 : vector<16x32xf32> to vector<2x8x32xf32>
    %25 = vector.shape_cast %22 : vector<16x32xf32> to vector<2x8x32xf32>
    %26 = vector.extract_strided_slice %23 {offsets = [0, 0, 0], sizes = [2, 8, 8], strides = [1, 1, 1]} : vector<2x8x32xf32> to vector<2x8x8xf32>
    %27 = vector.extract_strided_slice %24 {offsets = [0, 0, 0], sizes = [2, 8, 8], strides = [1, 1, 1]} : vector<2x8x32xf32> to vector<2x8x8xf32>
    "tpu.trace_start"() <{level = 10 : i32, message = "bld,bmd->blm"}> : () -> ()
    %cst_23 = arith.constant dense<0.000000e+00> : vector<2x8x8xf32>
    %28 = tpu.matmul %26, %27, %cst_23 {dimension_numbers = #tpu.dot_dimension_numbers<[2], [2], [1], [1], [0, 0, 0, 1, 1, 1], [0], [0]>} : vector<2x8x8xf32>, vector<2x8x8xf32>, vector<2x8x8xf32> -> vector<2x8x8xf32>
    "tpu.trace_stop"() : () -> ()
    %29 = vector.extract_strided_slice %23 {offsets = [0, 0, 8], sizes = [2, 8, 8], strides = [1, 1, 1]} : vector<2x8x32xf32> to vector<2x8x8xf32>
    %30 = vector.extract_strided_slice %24 {offsets = [0, 0, 8], sizes = [2, 8, 8], strides = [1, 1, 1]} : vector<2x8x32xf32> to vector<2x8x8xf32>
    "tpu.trace_start"() <{level = 10 : i32, message = "bld,bmd->blm"}> : () -> ()
    %cst_24 = arith.constant dense<0.000000e+00> : vector<2x8x8xf32>
    %31 = tpu.matmul %29, %30, %cst_24 {dimension_numbers = #tpu.dot_dimension_numbers<[2], [2], [1], [1], [0, 0, 0, 1, 1, 1], [0], [0]>} : vector<2x8x8xf32>, vector<2x8x8xf32>, vector<2x8x8xf32> -> vector<2x8x8xf32>
    "tpu.trace_stop"() : () -> ()
    %32 = vector.extract_strided_slice %23 {offsets = [0, 0, 16], sizes = [2, 8, 8], strides = [1, 1, 1]} : vector<2x8x32xf32> to vector<2x8x8xf32>
    %33 = vector.extract_strided_slice %24 {offsets = [0, 0, 16], sizes = [2, 8, 8], strides = [1, 1, 1]} : vector<2x8x32xf32> to vector<2x8x8xf32>
    "tpu.trace_start"() <{level = 10 : i32, message = "bld,bmd->blm"}> : () -> ()
    %cst_25 = arith.constant dense<0.000000e+00> : vector<2x8x8xf32>
    %34 = tpu.matmul %32, %33, %cst_25 {dimension_numbers = #tpu.dot_dimension_numbers<[2], [2], [1], [1], [0, 0, 0, 1, 1, 1], [0], [0]>} : vector<2x8x8xf32>, vector<2x8x8xf32>, vector<2x8x8xf32> -> vector<2x8x8xf32>
    "tpu.trace_stop"() : () -> ()
    %35 = vector.extract_strided_slice %23 {offsets = [0, 0, 24], sizes = [2, 8, 8], strides = [1, 1, 1]} : vector<2x8x32xf32> to vector<2x8x8xf32>
    %36 = vector.extract_strided_slice %24 {offsets = [0, 0, 24], sizes = [2, 8, 8], strides = [1, 1, 1]} : vector<2x8x32xf32> to vector<2x8x8xf32>
    "tpu.trace_start"() <{level = 10 : i32, message = "bld,bmd->blm"}> : () -> ()
    %cst_26 = arith.constant dense<0.000000e+00> : vector<2x8x8xf32>
    %37 = tpu.matmul %35, %36, %cst_26 {dimension_numbers = #tpu.dot_dimension_numbers<[2], [2], [1], [1], [0, 0, 0, 1, 1, 1], [0], [0]>} : vector<2x8x8xf32>, vector<2x8x8xf32>, vector<2x8x8xf32> -> vector<2x8x8xf32>
    "tpu.trace_stop"() : () -> ()
    %38 = vector.shape_cast %28 : vector<2x8x8xf32> to vector<1x2x8x8xf32>
    %39 = vector.shape_cast %31 : vector<2x8x8xf32> to vector<1x2x8x8xf32>
    %40 = vector.shape_cast %34 : vector<2x8x8xf32> to vector<1x2x8x8xf32>
    %41 = vector.shape_cast %37 : vector<2x8x8xf32> to vector<1x2x8x8xf32>
    %42 = tpu.concatenate %38, %39, %40, %41 in 0 : vector<1x2x8x8xf32>, vector<1x2x8x8xf32>, vector<1x2x8x8xf32>, vector<1x2x8x8xf32> -> vector<4x2x8x8xf32>
    %cst_27 = arith.constant dense<0xFF800000> : vector<2x8x8xf32>
    %43 = vector.multi_reduction <maximumf>, %42, %cst_27 [0] : vector<4x2x8x8xf32> to vector<2x8x8xf32>
    %44 = vector.shape_cast %43 : vector<2x8x8xf32> to vector<1x2x8x8xf32>
    %45 = vector.broadcast %44 : vector<1x2x8x8xf32> to vector<4x2x8x8xf32>
    %46 = arith.subf %42, %45 : vector<4x2x8x8xf32>
    %47 = math.exp %46 : vector<4x2x8x8xf32>
    %cst_28 = arith.constant dense<0.000000e+00> : vector<2x8x8xf32>
    %48 = vector.multi_reduction <add>, %47, %cst_28 [0] : vector<4x2x8x8xf32> to vector<2x8x8xf32>
    %49 = tpu.reciprocal %48 : vector<2x8x8xf32> -> vector<2x8x8xf32>
    %50 = vector.shape_cast %49 : vector<2x8x8xf32> to vector<1x2x8x8xf32>
    %51 = vector.broadcast %50 : vector<1x2x8x8xf32> to vector<4x2x8x8xf32>
    %52 = arith.mulf %47, %51 : vector<4x2x8x8xf32>
    %cst_29 = arith.constant 0.000000e+00 : f32
    %53 = vector.broadcast %cst_29 : f32 to vector<16x32xf32>
    %54 = vector.extract_strided_slice %25 {offsets = [0, 0, 0], sizes = [2, 8, 8], strides = [1, 1, 1]} : vector<2x8x32xf32> to vector<2x8x8xf32>
    %55 = vector.extract_strided_slice %52 {offsets = [0, 0, 0, 0], sizes = [1, 2, 8, 8], strides = [1, 1, 1, 1]} : vector<4x2x8x8xf32> to vector<1x2x8x8xf32>
    %56 = vector.shape_cast %55 : vector<1x2x8x8xf32> to vector<2x8x8xf32>
    "tpu.trace_start"() <{level = 10 : i32, message = "blm,bmd->bld"}> : () -> ()
    %cst_30 = arith.constant dense<0.000000e+00> : vector<2x8x8xf32>
    %57 = tpu.matmul %56, %54, %cst_30 {dimension_numbers = #tpu.dot_dimension_numbers<[2], [1], [1], [2], [0, 0, 0, 1, 1, 2], [0], [0]>} : vector<2x8x8xf32>, vector<2x8x8xf32>, vector<2x8x8xf32> -> vector<2x8x8xf32>
    "tpu.trace_stop"() : () -> ()
    %58 = vector.shape_cast %57 : vector<2x8x8xf32> to vector<16x8xf32>
    %c0_31 = arith.constant 0 : index
    %c0_32 = arith.constant 0 : index
    %59 = vector.load %arg10[%c0_31, %c0_32] : memref<32x32xf32, #tpu.memory_space<vmem>>, vector<8x32xf32>
    %cst_33 = arith.constant dense<0.000000e+00> : vector<16x32xf32>
    %60 = tpu.matmul %58, %59, %cst_33 {dimension_numbers = #tpu.dot_dimension_numbers<[1], [0], [0], [1], [0, 0, 1, 1], [], []>} : vector<16x8xf32>, vector<8x32xf32>, vector<16x32xf32> -> vector<16x32xf32>
    %61 = arith.addf %53, %60 : vector<16x32xf32>
    %62 = vector.extract_strided_slice %25 {offsets = [0, 0, 8], sizes = [2, 8, 8], strides = [1, 1, 1]} : vector<2x8x32xf32> to vector<2x8x8xf32>
    %63 = vector.extract_strided_slice %52 {offsets = [1, 0, 0, 0], sizes = [1, 2, 8, 8], strides = [1, 1, 1, 1]} : vector<4x2x8x8xf32> to vector<1x2x8x8xf32>
    %64 = vector.shape_cast %63 : vector<1x2x8x8xf32> to vector<2x8x8xf32>
    "tpu.trace_start"() <{level = 10 : i32, message = "blm,bmd->bld"}> : () -> ()
    %cst_34 = arith.constant dense<0.000000e+00> : vector<2x8x8xf32>
    %65 = tpu.matmul %64, %62, %cst_34 {dimension_numbers = #tpu.dot_dimension_numbers<[2], [1], [1], [2], [0, 0, 0, 1, 1, 2], [0], [0]>} : vector<2x8x8xf32>, vector<2x8x8xf32>, vector<2x8x8xf32> -> vector<2x8x8xf32>
    "tpu.trace_stop"() : () -> ()
    %66 = vector.shape_cast %65 : vector<2x8x8xf32> to vector<16x8xf32>
    %c8 = arith.constant 8 : index
    %c0_35 = arith.constant 0 : index
    %67 = vector.load %arg10[%c8, %c0_35] : memref<32x32xf32, #tpu.memory_space<vmem>>, vector<8x32xf32>
    %cst_36 = arith.constant dense<0.000000e+00> : vector<16x32xf32>
    %68 = tpu.matmul %66, %67, %cst_36 {dimension_numbers = #tpu.dot_dimension_numbers<[1], [0], [0], [1], [0, 0, 1, 1], [], []>} : vector<16x8xf32>, vector<8x32xf32>, vector<16x32xf32> -> vector<16x32xf32>
    %69 = arith.addf %61, %68 : vector<16x32xf32>
    %70 = vector.extract_strided_slice %25 {offsets = [0, 0, 16], sizes = [2, 8, 8], strides = [1, 1, 1]} : vector<2x8x32xf32> to vector<2x8x8xf32>
    %71 = vector.extract_strided_slice %52 {offsets = [2, 0, 0, 0], sizes = [1, 2, 8, 8], strides = [1, 1, 1, 1]} : vector<4x2x8x8xf32> to vector<1x2x8x8xf32>
    %72 = vector.shape_cast %71 : vector<1x2x8x8xf32> to vector<2x8x8xf32>
    "tpu.trace_start"() <{level = 10 : i32, message = "blm,bmd->bld"}> : () -> ()
    %cst_37 = arith.constant dense<0.000000e+00> : vector<2x8x8xf32>
    %73 = tpu.matmul %72, %70, %cst_37 {dimension_numbers = #tpu.dot_dimension_numbers<[2], [1], [1], [2], [0, 0, 0, 1, 1, 2], [0], [0]>} : vector<2x8x8xf32>, vector<2x8x8xf32>, vector<2x8x8xf32> -> vector<2x8x8xf32>
    "tpu.trace_stop"() : () -> ()
    %74 = vector.shape_cast %73 : vector<2x8x8xf32> to vector<16x8xf32>
    %c16 = arith.constant 16 : index
    %c0_38 = arith.constant 0 : index
    %75 = vector.load %arg10[%c16, %c0_38] : memref<32x32xf32, #tpu.memory_space<vmem>>, vector<8x32xf32>
    %cst_39 = arith.constant dense<0.000000e+00> : vector<16x32xf32>
    %76 = tpu.matmul %74, %75, %cst_39 {dimension_numbers = #tpu.dot_dimension_numbers<[1], [0], [0], [1], [0, 0, 1, 1], [], []>} : vector<16x8xf32>, vector<8x32xf32>, vector<16x32xf32> -> vector<16x32xf32>
    %77 = arith.addf %69, %76 : vector<16x32xf32>
    %78 = vector.extract_strided_slice %25 {offsets = [0, 0, 24], sizes = [2, 8, 8], strides = [1, 1, 1]} : vector<2x8x32xf32> to vector<2x8x8xf32>
    %79 = vector.extract_strided_slice %52 {offsets = [3, 0, 0, 0], sizes = [1, 2, 8, 8], strides = [1, 1, 1, 1]} : vector<4x2x8x8xf32> to vector<1x2x8x8xf32>
    %80 = vector.shape_cast %79 : vector<1x2x8x8xf32> to vector<2x8x8xf32>
    "tpu.trace_start"() <{level = 10 : i32, message = "blm,bmd->bld"}> : () -> ()
    %cst_40 = arith.constant dense<0.000000e+00> : vector<2x8x8xf32>
    %81 = tpu.matmul %80, %78, %cst_40 {dimension_numbers = #tpu.dot_dimension_numbers<[2], [1], [1], [2], [0, 0, 0, 1, 1, 2], [0], [0]>} : vector<2x8x8xf32>, vector<2x8x8xf32>, vector<2x8x8xf32> -> vector<2x8x8xf32>
    "tpu.trace_stop"() : () -> ()
    %82 = vector.shape_cast %81 : vector<2x8x8xf32> to vector<16x8xf32>
    %c24 = arith.constant 24 : index
    %c0_41 = arith.constant 0 : index
    %83 = vector.load %arg10[%c24, %c0_41] : memref<32x32xf32, #tpu.memory_space<vmem>>, vector<8x32xf32>
    %cst_42 = arith.constant dense<0.000000e+00> : vector<16x32xf32>
    %84 = tpu.matmul %82, %83, %cst_42 {dimension_numbers = #tpu.dot_dimension_numbers<[1], [0], [0], [1], [0, 0, 1, 1], [], []>} : vector<16x8xf32>, vector<8x32xf32>, vector<16x32xf32> -> vector<16x32xf32>
    %85 = arith.addf %77, %84 : vector<16x32xf32>
    %c0_43 = arith.constant 0 : index
    %c0_44 = arith.constant 0 : index
    %86 = vector.load %arg11[%c0_43, %c0_44] : memref<1x32xf32, #tpu.memory_space<vmem>>, vector<1x32xf32>
    %87 = vector.broadcast %86 : vector<1x32xf32> to vector<16x32xf32>
    %88 = arith.addf %85, %87 : vector<16x32xf32>
    %89 = vector.shape_cast %88 : vector<16x32xf32> to vector<2x8x32xf32>
    %c0_45 = arith.constant 0 : index
    %c0_46 = arith.constant 0 : index
    %c0_47 = arith.constant 0 : index
    %90 = vector.load %arg12[%c0_45, %c0_46, %c0_47] : memref<2x8x32xf32, #tpu.memory_space<vmem>>, vector<2x8x32xf32>
    tpu.vector_store %arg12[%c0_45, %c0_46, %c0_47], %89 {strides = array<i32>} : memref<2x8x32xf32, #tpu.memory_space<vmem>>, vector<2x8x32xf32>,
    return
  }
  func.func @transform_0(%arg0: i32) -> (i32, i32, i32) {
    %c0_i32 = arith.constant 0 : i32
    %c0_i32_0 = arith.constant 0 : i32
    %c0_i32_1 = arith.constant 0 : i32
    return %arg0, %c0_i32, %c0_i32_0 : i32, i32, i32
  }
  func.func @transform_1(%arg0: i32) -> (i32, i32, i32) {
    %c0_i32 = arith.constant 0 : i32
    %c0_i32_0 = arith.constant 0 : i32
    %c0_i32_1 = arith.constant 0 : i32
    return %arg0, %c0_i32, %c0_i32_0 : i32, i32, i32
  }
  func.func @transform_2(%arg0: i32) -> (i32, i32, i32) {
    %c0_i32 = arith.constant 0 : i32
    %c0_i32_0 = arith.constant 0 : i32
    %c0_i32_1 = arith.constant 0 : i32
    return %arg0, %c0_i32, %c0_i32_0 : i32, i32, i32
  }
  func.func @transform_3(%arg0: i32) -> (i32, i32) {
    %c0_i32 = arith.constant 0 : i32
    %c0_i32_0 = arith.constant 0 : i32
    %c0_i32_1 = arith.constant 0 : i32
    return %c0_i32, %c0_i32_0 : i32, i32
  }
  func.func @transform_4(%arg0: i32) -> (i32, i32) {
    %c0_i32 = arith.constant 0 : i32
    %c0_i32_0 = arith.constant 0 : i32
    %c0_i32_1 = arith.constant 0 : i32
    return %c0_i32, %c0_i32_0 : i32, i32
  }
  func.func @transform_5(%arg0: i32) -> (i32, i32) {
    %c0_i32 = arith.constant 0 : i32
    %c0_i32_0 = arith.constant 0 : i32
    %c0_i32_1 = arith.constant 0 : i32
    return %c0_i32, %c0_i32_0 : i32, i32
  }
  func.func @transform_6(%arg0: i32) -> (i32, i32) {
    %c0_i32 = arith.constant 0 : i32
    %c0_i32_0 = arith.constant 0 : i32
    %c0_i32_1 = arith.constant 0 : i32
    return %c0_i32, %c0_i32_0 : i32, i32
  }
  func.func @transform_7(%arg0: i32) -> (i32, i32) {
    %c0_i32 = arith.constant 0 : i32
    %c0_i32_0 = arith.constant 0 : i32
    %c0_i32_1 = arith.constant 0 : i32
    return %c0_i32, %c0_i32_0 : i32, i32
  }
  func.func @transform_8(%arg0: i32) -> (i32, i32) {
    %c0_i32 = arith.constant 0 : i32
    %c0_i32_0 = arith.constant 0 : i32
    %c0_i32_1 = arith.constant 0 : i32
    return %c0_i32, %c0_i32_0 : i32, i32
  }
  func.func @transform_9(%arg0: i32) -> (i32, i32) {
    %c0_i32 = arith.constant 0 : i32
    %c0_i32_0 = arith.constant 0 : i32
    %c0_i32_1 = arith.constant 0 : i32
    return %c0_i32, %c0_i32_0 : i32, i32
  }
  func.func @transform_10(%arg0: i32) -> (i32, i32) {
    %c0_i32 = arith.constant 0 : i32
    %c0_i32_0 = arith.constant 0 : i32
    %c0_i32_1 = arith.constant 0 : i32
    return %c0_i32, %c0_i32_0 : i32, i32
  }
  func.func @transform_11(%arg0: i32) -> (i32, i32, i32) {
    %c0_i32 = arith.constant 0 : i32
    %c0_i32_0 = arith.constant 0 : i32
    %c0_i32_1 = arith.constant 0 : i32
    return %arg0, %c0_i32, %c0_i32_0 : i32, i32, i32
  }
}

</mosaic_0001>

<llo_original>
// kernel: tpu_custom_call.1
$region0: #{tpu_custom_call.1}
  #allocation0 [shape = 'u32[]', space=smem, size = 0x4, offset = 0x4, fixed_abs, tag = 'smem constant byte address 0x4 - core index']
  #allocation1 [shape = 'u32[144,128]{1,0:T(1,128)}', space=vmem, size = 0x12000, scoped, tag = 'internal scratch']
  %s0 = inlined_call_operand.hbm [shape: f32[2,8,32], index: 0, kind: input, shape index: {}]
  %s1 = inlined_call_operand.hbm [shape: f32[2,8,32], index: 1, kind: input, shape index: {}]
  %s2 = inlined_call_operand.hbm [shape: f32[2,8,32], index: 2, kind: input, shape index: {}]
  %s3 = inlined_call_operand.hbm [shape: f32[32,32], index: 3, kind: input, shape index: {}]
  %s4 = inlined_call_operand.vmem [shape: f32[1,32], index: 4, kind: input, shape index: {}]
  %s5 = inlined_call_operand.hbm [shape: f32[32,32], index: 5, kind: input, shape index: {}]
  %s6 = inlined_call_operand.vmem [shape: f32[1,32], index: 6, kind: input, shape index: {}]
  %s7 = inlined_call_operand.hbm [shape: f32[32,32], index: 7, kind: input, shape index: {}]
  %s8 = inlined_call_operand.vmem [shape: f32[1,32], index: 8, kind: input, shape index: {}]
  %s9 = inlined_call_operand.hbm [shape: f32[32,32], index: 9, kind: input, shape index: {}]
  %s10 = inlined_call_operand.vmem [shape: f32[1,32], index: 10, kind: input, shape index: {}]
  %s11 = inlined_call_operand.hbm [shape: f32[2,8,32], index: 11, kind: output, shape index: {}]
  %s12 = sld [smem:[#allocation0]]
  $region82: #{tpu_custom_call.1} parent=0
    _
  %s14 = ssub.s32 1, %s12
  %s15 = scalar_select 0, %s14, %s12
  $region1: #{tpu_custom_call.1} parent=0
    #allocation2 [shape = 'u8[8192]{0}', space=vmem, size = 0x2000, scoped, tag = 'input window, operand 0, single buffered']
    #allocation3 [shape = 's32[1]{0}', space=sflag, size = 0x4, scoped, tag = 'scoped memory for tpu_custom_call.1']
    #allocation4 [shape = 's32[1]{0}', space=sflag, size = 0x4, scoped, tag = 'scoped memory for tpu_custom_call.1']
    #allocation5 [shape = 'u8[8192]{0}', space=vmem, size = 0x2000, scoped, tag = 'input window, operand 1, single buffered']
    #allocation6 [shape = 's32[1]{0}', space=sflag, size = 0x4, scoped, tag = 'scoped memory for tpu_custom_call.1']
    #allocation7 [shape = 'u8[8192]{0}', space=vmem, size = 0x2000, scoped, tag = 'input window, operand 2, single buffered']
    #allocation8 [shape = 'u8[16384]{0}', space=vmem, size = 0x4000, scoped, tag = 'input window, operand 3, single buffered']
    #allocation9 [shape = 's32[1]{0}', space=sflag, size = 0x4, scoped, tag = 'scoped memory for tpu_custom_call.1']
    #allocation10 [shape = 'u8[16384]{0}', space=vmem, size = 0x4000, scoped, tag = 'input window, operand 5, single buffered']
    #allocation11 [shape = 'u8[16384]{0}', space=vmem, size = 0x4000, scoped, tag = 'input window, operand 7, single buffered']
    #allocation12 [shape = 's32[1]{0}', space=sflag, size = 0x4, scoped, tag = 'scoped memory for tpu_custom_call.1']
    #allocation13 [shape = 'u8[16384]{0}', space=vmem, size = 0x4000, scoped, tag = 'input window, operand 9, single buffered']
    #allocation14 [shape = 'u8[8192]{0}', space=vmem, size = 0x2000, scoped, tag = 'output window, operand 0, single buffered']
    %16 = vsyncpa [#allocation3], 0
    %17 = vsyncpa [#allocation6], 0
    %18 = vsyncpa [#allocation9], 0
    %19 = vsyncpa [#allocation12], 0
    %20 = vsyncpa [#allocation4], 0
    // Predicated region
    $region2: #{tpu_custom_call.1} parent=1 // pred_check
      _
    $region3: #{tpu_custom_call.1} parent=1 // pred_check_branch
      %22 = sbr.rel (0) target = $region5
    $region4: #{tpu_custom_call.1} parent=1 // pred_region
      %s24 = ssub.s32 256, 256
      %25 = vsyncadd [#allocation3], %s24
      %s26 = sshll.u32 [#allocation2], 4
      %s27 = int_to_ptr.vmem [resolvable:$true] %s26
      %32 = dma.hbm_to_vmem [thread:$0]  %s0, 256, %s27, [#allocation3], 128, 128, 8
    $region5: #{tpu_custom_call.1} parent=1 // pred_fallthru
      _
    // Predicated region
    $region6: #{tpu_custom_call.1} parent=1 // pred_check
      _
    $region7: #{tpu_custom_call.1} parent=1 // pred_check_branch
      %34 = sbr.rel (0) target = $region9
    $region8: #{tpu_custom_call.1} parent=1 // pred_region
      %s36 = ssub.s32 256, 256
      %37 = vsyncadd [#allocation6], %s36
      %s38 = sshll.u32 [#allocation5], 4
      %s39 = int_to_ptr.vmem [resolvable:$true] %s38
      %44 = dma.hbm_to_vmem [thread:$0]  %s1, 256, %s39, [#allocation6], 128, 128, 8
    $region9: #{tpu_custom_call.1} parent=1 // pred_fallthru
      _
    // Predicated region
    $region10: #{tpu_custom_call.1} parent=1 // pred_check
      _
    $region11: #{tpu_custom_call.1} parent=1 // pred_check_branch
      %46 = sbr.rel (0) target = $region13
    $region12: #{tpu_custom_call.1} parent=1 // pred_region
      %s48 = ssub.s32 256, 256
      %49 = vsyncadd [#allocation6], %s48
      %s50 = sshll.u32 [#allocation7], 4
      %s51 = int_to_ptr.vmem [resolvable:$true] %s50
      %56 = dma.hbm_to_vmem [thread:$0]  %s2, 256, %s51, [#allocation6], 128, 128, 8
    $region13: #{tpu_custom_call.1} parent=1 // pred_fallthru
      _
    // Predicated region
    $region14: #{tpu_custom_call.1} parent=1 // pred_check
      _
    $region15: #{tpu_custom_call.1} parent=1 // pred_check_branch
      %58 = sbr.rel (0) target = $region17
    $region16: #{tpu_custom_call.1} parent=1 // pred_region
      %s60 = ssub.s32 512, 512
      %61 = vsyncadd [#allocation9], %s60
      %s62 = sshll.u32 [#allocation8], 4
      %s63 = int_to_ptr.vmem [resolvable:$true] %s62
      %68 = dma.hbm_to_vmem [thread:$0]  %s3, 512, %s63, [#allocation9], 128, 128, 8
    $region17: #{tpu_custom_call.1} parent=1 // pred_fallthru
      _
    // Predicated region
    $region18: #{tpu_custom_call.1} parent=1 // pred_check
      _
    $region19: #{tpu_custom_call.1} parent=1 // pred_check_branch
      %70 = sbr.rel (0) target = $region21
    $region20: #{tpu_custom_call.1} parent=1 // pred_region
      _
    $region21: #{tpu_custom_call.1} parent=1 // pred_fallthru
      _
    // Predicated region
    $region22: #{tpu_custom_call.1} parent=1 // pred_check
      _
    $region23: #{tpu_custom_call.1} parent=1 // pred_check_branch
      %72 = sbr.rel (0) target = $region25
    $region24: #{tpu_custom_call.1} parent=1 // pred_region
      %s74 = ssub.s32 512, 512
      %75 = vsyncadd [#allocation9], %s74
      %s76 = sshll.u32 [#allocation10], 4
      %s77 = int_to_ptr.vmem [resolvable:$true] %s76
      %82 = dma.hbm_to_vmem [thread:$0]  %s5, 512, %s77, [#allocation9], 128, 128, 8
    $region25: #{tpu_custom_call.1} parent=1 // pred_fallthru
      _
    // Predicated region
    $region26: #{tpu_custom_call.1} parent=1 // pred_check
      _
    $region27: #{tpu_custom_call.1} parent=1 // pred_check_branch
      %84 = sbr.rel (0) target = $region29
    $region28: #{tpu_custom_call.1} parent=1 // pred_region
      _
    $region29: #{tpu_custom_call.1} parent=1 // pred_fallthru
      _
    // Predicated region
    $region30: #{tpu_custom_call.1} parent=1 // pred_check
      _
    $region31: #{tpu_custom_call.1} parent=1 // pred_check_branch
      %86 = sbr.rel (0) target = $region33
    $region32: #{tpu_custom_call.1} parent=1 // pred_region
      %s88 = ssub.s32 512, 512
      %89 = vsyncadd [#allocation12], %s88
      %s90 = sshll.u32 [#allocation11], 4
      %s91 = int_to_ptr.vmem [resolvable:$true] %s90
      %96 = dma.hbm_to_vmem [thread:$0]  %s7, 512, %s91, [#allocation12], 128, 128, 8
    $region33: #{tpu_custom_call.1} parent=1 // pred_fallthru
      _
    // Predicated region
    $region34: #{tpu_custom_call.1} parent=1 // pred_check
      _
    $region35: #{tpu_custom_call.1} parent=1 // pred_check_branch
      %98 = sbr.rel (0) target = $region37
    $region36: #{tpu_custom_call.1} parent=1 // pred_region
      _
    $region37: #{tpu_custom_call.1} parent=1 // pred_fallthru
      _
    // Predicated region
    $region38: #{tpu_custom_call.1} parent=1 // pred_check
      _
    $region39: #{tpu_custom_call.1} parent=1 // pred_check_branch
      %100 = sbr.rel (0) target = $region41
    $region40: #{tpu_custom_call.1} parent=1 // pred_region
      %s102 = ssub.s32 512, 512
      %103 = vsyncadd [#allocation12], %s102
      %s104 = sshll.u32 [#allocation13], 4
      %s105 = int_to_ptr.vmem [resolvable:$true] %s104
      %110 = dma.hbm_to_vmem [thread:$0]  %s9, 512, %s105, [#allocation12], 128, 128, 8
    $region41: #{tpu_custom_call.1} parent=1 // pred_fallthru
      _
    // Predicated region
    $region42: #{tpu_custom_call.1} parent=1 // pred_check
      _
    $region43: #{tpu_custom_call.1} parent=1 // pred_check_branch
      %112 = sbr.rel (0) target = $region45
    $region44: #{tpu_custom_call.1} parent=1 // pred_region
      _
    $region45: #{tpu_custom_call.1} parent=1 // pred_fallthru
      _
    // Predicated region
    $region46: #{tpu_custom_call.1} parent=1 // pred_check
      _
    $region47: #{tpu_custom_call.1} parent=1 // pred_check_branch
      %114 = sbr.rel (0) target = $region49
    $region48: #{tpu_custom_call.1} parent=1 // pred_region
      %115 = dma.done [#allocation3], 256
    $region49: #{tpu_custom_call.1} parent=1 // pred_fallthru
      _
    // Predicated region
    $region50: #{tpu_custom_call.1} parent=1 // pred_check
      _
    $region51: #{tpu_custom_call.1} parent=1 // pred_check_branch
      %117 = sbr.rel (0) target = $region53
    $region52: #{tpu_custom_call.1} parent=1 // pred_region
      %118 = dma.done [#allocation6], 256
    $region53: #{tpu_custom_call.1} parent=1 // pred_fallthru
      _
    // Predicated region
    $region54: #{tpu_custom_call.1} parent=1 // pred_check
      _
    $region55: #{tpu_custom_call.1} parent=1 // pred_check_branch
      %120 = sbr.rel (0) target = $region57
    $region56: #{tpu_custom_call.1} parent=1 // pred_region
      %121 = dma.done [#allocation6], 256
    $region57: #{tpu_custom_call.1} parent=1 // pred_fallthru
      _
    // Predicated region
    $region58: #{tpu_custom_call.1} parent=1 // pred_check
      _
    $region59: #{tpu_custom_call.1} parent=1 // pred_check_branch
      %123 = sbr.rel (0) target = $region61
    $region60: #{tpu_custom_call.1} parent=1 // pred_region
      %124 = dma.done [#allocation9], 512
    $region61: #{tpu_custom_call.1} parent=1 // pred_fallthru
      _
    // Predicated region
    $region62: #{tpu_custom_call.1} parent=1 // pred_check
      _
    $region63: #{tpu_custom_call.1} parent=1 // pred_check_branch
      %126 = sbr.rel (0) target = $region65
    $region64: #{tpu_custom_call.1} parent=1 // pred_region
      %127 = dma.done [#allocation9], 512
    $region65: #{tpu_custom_call.1} parent=1 // pred_fallthru
      _
    // Predicated region
    $region66: #{tpu_custom_call.1} parent=1 // pred_check
      _
    $region67: #{tpu_custom_call.1} parent=1 // pred_check_branch
      %129 = sbr.rel (0) target = $region69
    $region68: #{tpu_custom_call.1} parent=1 // pred_region
      %130 = dma.done [#allocation12], 512
    $region69: #{tpu_custom_call.1} parent=1 // pred_fallthru
      _
    // Predicated region
    $region70: #{tpu_custom_call.1} parent=1 // pred_check
      _
    $region71: #{tpu_custom_call.1} parent=1 // pred_check_branch
      %132 = sbr.rel (0) target = $region73
    $region72: #{tpu_custom_call.1} parent=1 // pred_region
      %133 = dma.done [#allocation12], 512
    $region73: #{tpu_custom_call.1} parent=1 // pred_fallthru
      _
    %v134 = vld [vmem:[#allocation2] sm:$0xff]
    %v135 = vld [vmem:[#allocation2 + $0x8] sm:$0xff]
    %v136 = vld [vmem:[#allocation5] sm:$0xff]
    %v137 = vld [vmem:[#allocation5 + $0x8] sm:$0xff]
    %v138 = vld [vmem:[#allocation7] sm:$0xff]
    %v139 = vld [vmem:[#allocation7 + $0x8] sm:$0xff]
    %v140 = vld [vmem:[#allocation8] sm:$0xff]
    %v141 = vld [vmem:[#allocation8 + $0x8] sm:$0xff]
    %v142 = vld [vmem:[#allocation8 + $0x10] sm:$0xff]
    %v143 = vld [vmem:[#allocation8 + $0x18] sm:$0xff]
    %v144 = vld [vmem:[%s4] sm:$0x1]
    %v146 = vlaneseq
    %v147 = vshrl.u32 %v146, 7
    %v148 = vsub.s32 0, %v147
    %v149 = vrot.slane %v144, %v148
    %vm151 = vcmask 261120
    %v153 = vsel %vm151, %v134, 0
    %v156 = vsel %vm151, %v135, 0
    %158 = vmatprep.subr.mxu0 0.0
    %159 = vmatpush1.msra.mxu0 0.0
    %160 = vmatprep.subr.mxu0 0.0
    %161 = vmatpush1.msra.mxu0 0.0
    %162 = vmatprep.subr.mxu0 0.0
    %163 = vmatpush1.msra.mxu0 0.0
    %164 = vmatprep.subr.mxu0 0.0
    %165 = vmatpush1.msra.mxu0 0.0
    %166 = vmatprep.subr.mxu0 0.0
    %167 = vmatpush1.msra.mxu0 0.0
    %168 = vmatprep.subr.mxu0 0.0
    %169 = vmatpush1.msra.mxu0 0.0
    %170 = vmatprep.subr.mxu0 0.0
    %171 = vmatpush1.msra.mxu0 0.0
    %172 = vmatprep.subr.mxu0 0.0
    %173 = vmatpush1.msra.mxu0 0.0
    %174 = vmatprep.subr.mxu0 0.0
    %175 = vmatpush1.msra.mxu0 0.0
    %176 = vmatprep.subr.mxu0 0.0
    %177 = vmatpush1.msra.mxu0 0.0
    %178 = vmatprep.subr.mxu0 0.0
    %179 = vmatpush1.msra.mxu0 0.0
    %180 = vmatprep.subr.mxu0 0.0
    %181 = vmatpush1.msra.mxu0 0.0
    %182 = vmatprep.subr.mxu0 0.0
    %183 = vmatpush1.msra.mxu0 %v143
    %184 = vmatprep.subr.mxu0 0.0
    %185 = vmatpush1.msra.mxu0 %v142
    %186 = vmatprep.subr.mxu0 0.0
    %187 = vmatpush1.msra.mxu0 %v141
    %188 = vmatprep.subr.mxu0 0.0
    %189 = vmatpush1.msra.mxu0 %v140
    %190 = vmatprep.subr.mxu0 0.0
    %191 = vmatpush2.msra.mxu0 0.0
    %192 = vmatprep.subr.mxu0 0.0
    %193 = vmatpush2.msra.mxu0 0.0
    %194 = vmatprep.subr.mxu0 0.0
    %195 = vmatpush2.msra.mxu0 0.0
    %196 = vmatprep.subr.mxu0 0.0
    %197 = vmatpush2.msra.mxu0 0.0
    %198 = vmatprep.subr.mxu0 0.0
    %199 = vmatpush2.msra.mxu0 0.0
    %200 = vmatprep.subr.mxu0 0.0
    %201 = vmatpush2.msra.mxu0 0.0
    %202 = vmatprep.subr.mxu0 0.0
    %203 = vmatpush2.msra.mxu0 0.0
    %204 = vmatprep.subr.mxu0 0.0
    %205 = vmatpush2.msra.mxu0 0.0
    %206 = vmatprep.subr.mxu0 0.0
    %207 = vmatpush2.msra.mxu0 0.0
    %208 = vmatprep.subr.mxu0 0.0
    %209 = vmatpush2.msra.mxu0 0.0
    %210 = vmatprep.subr.mxu0 0.0
    %211 = vmatpush2.msra.mxu0 0.0
    %212 = vmatprep.subr.mxu0 0.0
    %213 = vmatpush2.msra.mxu0 0.0
    %214 = vmatprep.subr.mxu0 0.0
    %215 = vmatpush2.msra.mxu0 0.0
    %216 = vmatprep.subr.mxu0 0.0
    %217 = vmatpush2.msra.mxu0 0.0
    %218 = vmatprep.subr.mxu0 0.0
    %219 = vmatpush2.msra.mxu0 0.0
    %220 = vmatprep.subr.mxu0 0.0
    %221 = vmatpush2.msra.mxu0 0.0
    %222 = vmatprep.mubr.f32.mxu0 0.0
    %223 = vmatmul.mubr.f32.gmra.mxu0 %v153
    %v224 = vpop.f32.mrf.mxu0
    %v225 = vadd.f32 %v149, %v224
    %v226 = vpop.f32.mrf.mxu0
    %227 = vmatprep.mubr.f32.mxu0 0.0
    %228 = vmatmul.mubr.f32.gmra.mxu0 %v156
    %v229 = vpop.f32.mrf.mxu0
    %v230 = vadd.f32 %v149, %v229
    %v231 = vpop.f32.mrf.mxu0
    %232 = vdwg.mxu0
    %v233 = vmul.f32 %v225, 0.35355338
    %v234 = vmul.f32 %v230, 0.35355338
    %v235 = vld [vmem:[#allocation10] sm:$0xff]
    %v236 = vld [vmem:[#allocation10 + $0x8] sm:$0xff]
    %v237 = vld [vmem:[#allocation10 + $0x10] sm:$0xff]
    %v238 = vld [vmem:[#allocation10 + $0x18] sm:$0xff]
    %v239 = vld [vmem:[%s6] sm:$0x1]
    %v241 = vlaneseq
    %v242 = vshrl.u32 %v241, 7
    %v243 = vsub.s32 0, %v242
    %v244 = vrot.slane %v239, %v243
    %v247 = vsel %vm151, %v136, 0
    %v250 = vsel %vm151, %v137, 0
    %252 = vmatprep.subr.mxu0 0.0
    %253 = vmatpush1.msra.mxu0 0.0
    %254 = vmatprep.subr.mxu0 0.0
    %255 = vmatpush1.msra.mxu0 0.0
    %256 = vmatprep.subr.mxu0 0.0
    %257 = vmatpush1.msra.mxu0 0.0
    %258 = vmatprep.subr.mxu0 0.0
    %259 = vmatpush1.msra.mxu0 0.0
    %260 = vmatprep.subr.mxu0 0.0
    %261 = vmatpush1.msra.mxu0 0.0
    %262 = vmatprep.subr.mxu0 0.0
    %263 = vmatpush1.msra.mxu0 0.0
    %264 = vmatprep.subr.mxu0 0.0
    %265 = vmatpush1.msra.mxu0 0.0
    %266 = vmatprep.subr.mxu0 0.0
    %267 = vmatpush1.msra.mxu0 0.0
    %268 = vmatprep.subr.mxu0 0.0
    %269 = vmatpush1.msra.mxu0 0.0
    %270 = vmatprep.subr.mxu0 0.0
    %271 = vmatpush1.msra.mxu0 0.0
    %272 = vmatprep.subr.mxu0 0.0
    %273 = vmatpush1.msra.mxu0 0.0
    %274 = vmatprep.subr.mxu0 0.0
    %275 = vmatpush1.msra.mxu0 0.0
    %276 = vmatprep.subr.mxu0 0.0
    %277 = vmatpush1.msra.mxu0 %v238
    %278 = vmatprep.subr.mxu0 0.0
    %279 = vmatpush1.msra.mxu0 %v237
    %280 = vmatprep.subr.mxu0 0.0
    %281 = vmatpush1.msra.mxu0 %v236
    %282 = vmatprep.subr.mxu0 0.0
    %283 = vmatpush1.msra.mxu0 %v235
    %284 = vmatprep.subr.mxu0 0.0
    %285 = vmatpush2.msra.mxu0 0.0
    %286 = vmatprep.subr.mxu0 0.0
    %287 = vmatpush2.msra.mxu0 0.0
    %288 = vmatprep.subr.mxu0 0.0
    %289 = vmatpush2.msra.mxu0 0.0
    %290 = vmatprep.subr.mxu0 0.0
    %291 = vmatpush2.msra.mxu0 0.0
    %292 = vmatprep.subr.mxu0 0.0
    %293 = vmatpush2.msra.mxu0 0.0
    %294 = vmatprep.subr.mxu0 0.0
    %295 = vmatpush2.msra.mxu0 0.0
    %296 = vmatprep.subr.mxu0 0.0
    %297 = vmatpush2.msra.mxu0 0.0
    %298 = vmatprep.subr.mxu0 0.0
    %299 = vmatpush2.msra.mxu0 0.0
    %300 = vmatprep.subr.mxu0 0.0
    %301 = vmatpush2.msra.mxu0 0.0
    %302 = vmatprep.subr.mxu0 0.0
    %303 = vmatpush2.msra.mxu0 0.0
    %304 = vmatprep.subr.mxu0 0.0
    %305 = vmatpush2.msra.mxu0 0.0
    %306 = vmatprep.subr.mxu0 0.0
    %307 = vmatpush2.msra.mxu0 0.0
    %308 = vmatprep.subr.mxu0 0.0
    %309 = vmatpush2.msra.mxu0 0.0
    %310 = vmatprep.subr.mxu0 0.0
    %311 = vmatpush2.msra.mxu0 0.0
    %312 = vmatprep.subr.mxu0 0.0
    %313 = vmatpush2.msra.mxu0 0.0
    %314 = vmatprep.subr.mxu0 0.0
    %315 = vmatpush2.msra.mxu0 0.0
    %316 = vmatprep.mubr.f32.mxu0 0.0
    %317 = vmatmul.mubr.f32.gmra.mxu0 %v247
    %v318 = vpop.f32.mrf.mxu0
    %v319 = vadd.f32 %v244, %v318
    %v320 = vpop.f32.mrf.mxu0
    %321 = vmatprep.mubr.f32.mxu0 0.0
    %322 = vmatmul.mubr.f32.gmra.mxu0 %v250
    %v323 = vpop.f32.mrf.mxu0
    %v324 = vadd.f32 %v244, %v323
    %v325 = vpop.f32.mrf.mxu0
    %326 = vdwg.mxu0
    %v327 = vld [vmem:[#allocation11] sm:$0xff]
    %v328 = vld [vmem:[#allocation11 + $0x8] sm:$0xff]
    %v329 = vld [vmem:[#allocation11 + $0x10] sm:$0xff]
    %v330 = vld [vmem:[#allocation11 + $0x18] sm:$0xff]
    %v331 = vld [vmem:[%s8] sm:$0x1]
    %v333 = vlaneseq
    %v334 = vshrl.u32 %v333, 7
    %v335 = vsub.s32 0, %v334
    %v336 = vrot.slane %v331, %v335
    %v339 = vsel %vm151, %v138, 0
    %v342 = vsel %vm151, %v139, 0
    %344 = vmatprep.subr.mxu0 0.0
    %345 = vmatpush1.msra.mxu0 0.0
    %346 = vmatprep.subr.mxu0 0.0
    %347 = vmatpush1.msra.mxu0 0.0
    %348 = vmatprep.subr.mxu0 0.0
    %349 = vmatpush1.msra.mxu0 0.0
    %350 = vmatprep.subr.mxu0 0.0
    %351 = vmatpush1.msra.mxu0 0.0
    %352 = vmatprep.subr.mxu0 0.0
    %353 = vmatpush1.msra.mxu0 0.0
    %354 = vmatprep.subr.mxu0 0.0
    %355 = vmatpush1.msra.mxu0 0.0
    %356 = vmatprep.subr.mxu0 0.0
    %357 = vmatpush1.msra.mxu0 0.0
    %358 = vmatprep.subr.mxu0 0.0
    %359 = vmatpush1.msra.mxu0 0.0
    %360 = vmatprep.subr.mxu0 0.0
    %361 = vmatpush1.msra.mxu0 0.0
    %362 = vmatprep.subr.mxu0 0.0
    %363 = vmatpush1.msra.mxu0 0.0
    %364 = vmatprep.subr.mxu0 0.0
    %365 = vmatpush1.msra.mxu0 0.0
    %366 = vmatprep.subr.mxu0 0.0
    %367 = vmatpush1.msra.mxu0 0.0
    %368 = vmatprep.subr.mxu0 0.0
    %369 = vmatpush1.msra.mxu0 %v330
    %370 = vmatprep.subr.mxu0 0.0
    %371 = vmatpush1.msra.mxu0 %v329
    %372 = vmatprep.subr.mxu0 0.0
    %373 = vmatpush1.msra.mxu0 %v328
    %374 = vmatprep.subr.mxu0 0.0
    %375 = vmatpush1.msra.mxu0 %v327
    %376 = vmatprep.subr.mxu0 0.0
    %377 = vmatpush2.msra.mxu0 0.0
    %378 = vmatprep.subr.mxu0 0.0
    %379 = vmatpush2.msra.mxu0 0.0
    %380 = vmatprep.subr.mxu0 0.0
    %381 = vmatpush2.msra.mxu0 0.0
    %382 = vmatprep.subr.mxu0 0.0
    %383 = vmatpush2.msra.mxu0 0.0
    %384 = vmatprep.subr.mxu0 0.0
    %385 = vmatpush2.msra.mxu0 0.0
    %386 = vmatprep.subr.mxu0 0.0
    %387 = vmatpush2.msra.mxu0 0.0
    %388 = vmatprep.subr.mxu0 0.0
    %389 = vmatpush2.msra.mxu0 0.0
    %390 = vmatprep.subr.mxu0 0.0
    %391 = vmatpush2.msra.mxu0 0.0
    %392 = vmatprep.subr.mxu0 0.0
    %393 = vmatpush2.msra.mxu0 0.0
    %394 = vmatprep.subr.mxu0 0.0
    %395 = vmatpush2.msra.mxu0 0.0
    %396 = vmatprep.subr.mxu0 0.0
    %397 = vmatpush2.msra.mxu0 0.0
    %398 = vmatprep.subr.mxu0 0.0
    %399 = vmatpush2.msra.mxu0 0.0
    %400 = vmatprep.subr.mxu0 0.0
    %401 = vmatpush2.msra.mxu0 0.0
    %402 = vmatprep.subr.mxu0 0.0
    %403 = vmatpush2.msra.mxu0 0.0
    %404 = vmatprep.subr.mxu0 0.0
    %405 = vmatpush2.msra.mxu0 0.0
    %406 = vmatprep.subr.mxu0 0.0
    %407 = vmatpush2.msra.mxu0 0.0
    %408 = vmatprep.mubr.f32.mxu0 0.0
    %409 = vmatmul.mubr.f32.gmra.mxu0 %v339
    %v410 = vpop.f32.mrf.mxu0
    %v411 = vadd.f32 %v336, %v410
    %v412 = vpop.f32.mrf.mxu0
    %413 = vmatprep.mubr.f32.mxu0 0.0
    %414 = vmatmul.mubr.f32.gmra.mxu0 %v342
    %v415 = vpop.f32.mrf.mxu0
    %v416 = vadd.f32 %v336, %v415
    %v417 = vpop.f32.mrf.mxu0
    %418 = vdwg.mxu0
    %vm419 = vcmask 64512
    %v421 = vsel %vm419, %v233, 0
    %v424 = vsel %vm419, %v319, 0
    %426 = vmatprep.subr.mxu0 0.0
    %427 = vmatpush1.xpose.msra.mxu0 0.0
    %428 = vmatprep.subr.mxu0 0.0
    %429 = vmatpush1.xpose.msra.mxu0 0.0
    %430 = vmatprep.subr.mxu0 0.0
    %431 = vmatpush1.xpose.msra.mxu0 0.0
    %432 = vmatprep.subr.mxu0 0.0
    %433 = vmatpush1.xpose.msra.mxu0 0.0
    %434 = vmatprep.subr.mxu0 0.0
    %435 = vmatpush1.xpose.msra.mxu0 0.0
    %436 = vmatprep.subr.mxu0 0.0
    %437 = vmatpush1.xpose.msra.mxu0 0.0
    %438 = vmatprep.subr.mxu0 0.0
    %439 = vmatpush1.xpose.msra.mxu0 0.0
    %440 = vmatprep.subr.mxu0 0.0
    %441 = vmatpush1.xpose.msra.mxu0 0.0
    %442 = vmatprep.subr.mxu0 0.0
    %443 = vmatpush1.xpose.msra.mxu0 0.0
    %444 = vmatprep.subr.mxu0 0.0
    %445 = vmatpush1.xpose.msra.mxu0 0.0
    %446 = vmatprep.subr.mxu0 0.0
    %447 = vmatpush1.xpose.msra.mxu0 0.0
    %448 = vmatprep.subr.mxu0 0.0
    %449 = vmatpush1.xpose.msra.mxu0 0.0
    %450 = vmatprep.subr.mxu0 0.0
    %451 = vmatpush1.xpose.msra.mxu0 0.0
    %452 = vmatprep.subr.mxu0 0.0
    %453 = vmatpush1.xpose.msra.mxu0 0.0
    %454 = vmatprep.subr.mxu0 0.0
    %455 = vmatpush1.xpose.msra.mxu0 0.0
    %456 = vmatprep.subr.mxu0 0.0
    %457 = vmatpush1.xpose.msra.mxu0 %v424
    %458 = vmatprep.subr.mxu0 0.0
    %459 = vmatpush2.xpose.msra.mxu0 0.0
    %460 = vmatprep.subr.mxu0 0.0
    %461 = vmatpush2.xpose.msra.mxu0 0.0
    %462 = vmatprep.subr.mxu0 0.0
    %463 = vmatpush2.xpose.msra.mxu0 0.0
    %464 = vmatprep.subr.mxu0 0.0
    %465 = vmatpush2.xpose.msra.mxu0 0.0
    %466 = vmatprep.subr.mxu0 0.0
    %467 = vmatpush2.xpose.msra.mxu0 0.0
    %468 = vmatprep.subr.mxu0 0.0
    %469 = vmatpush2.xpose.msra.mxu0 0.0
    %470 = vmatprep.subr.mxu0 0.0
    %471 = vmatpush2.xpose.msra.mxu0 0.0
    %472 = vmatprep.subr.mxu0 0.0
    %473 = vmatpush2.xpose.msra.mxu0 0.0
    %474 = vmatprep.subr.mxu0 0.0
    %475 = vmatpush2.xpose.msra.mxu0 0.0
    %476 = vmatprep.subr.mxu0 0.0
    %477 = vmatpush2.xpose.msra.mxu0 0.0
    %478 = vmatprep.subr.mxu0 0.0
    %479 = vmatpush2.xpose.msra.mxu0 0.0
    %480 = vmatprep.subr.mxu0 0.0
    %481 = vmatpush2.xpose.msra.mxu0 0.0
    %482 = vmatprep.subr.mxu0 0.0
    %483 = vmatpush2.xpose.msra.mxu0 0.0
    %484 = vmatprep.subr.mxu0 0.0
    %485 = vmatpush2.xpose.msra.mxu0 0.0
    %486 = vmatprep.subr.mxu0 0.0
    %487 = vmatpush2.xpose.msra.mxu0 0.0
    %488 = vmatprep.subr.mxu0 0.0
    %489 = vmatpush2.xpose.msra.mxu0 0.0
    %490 = vmatprep.mubr.f32.mxu0 0.0
    %491 = vmatmul.mubr.f32.gmra.mxu0 %v421
    %v492 = vpop.f32.mrf.mxu0
    %v493 = vadd.f32 0.0, %v492
    %v494 = vpop.f32.mrf.mxu0
    %495 = vdwg.mxu0
    %v497 = vsel %vm419, %v234, 0
    %v500 = vsel %vm419, %v324, 0
    %502 = vmatprep.subr.mxu0 0.0
    %503 = vmatpush1.xpose.msra.mxu0 0.0
    %504 = vmatprep.subr.mxu0 0.0
    %505 = vmatpush1.xpose.msra.mxu0 0.0
    %506 = vmatprep.subr.mxu0 0.0
    %507 = vmatpush1.xpose.msra.mxu0 0.0
    %508 = vmatprep.subr.mxu0 0.0
    %509 = vmatpush1.xpose.msra.mxu0 0.0
    %510 = vmatprep.subr.mxu0 0.0
    %511 = vmatpush1.xpose.msra.mxu0 0.0
    %512 = vmatprep.subr.mxu0 0.0
    %513 = vmatpush1.xpose.msra.mxu0 0.0
    %514 = vmatprep.subr.mxu0 0.0
    %515 = vmatpush1.xpose.msra.mxu0 0.0
    %516 = vmatprep.subr.mxu0 0.0
    %517 = vmatpush1.xpose.msra.mxu0 0.0
    %518 = vmatprep.subr.mxu0 0.0
    %519 = vmatpush1.xpose.msra.mxu0 0.0
    %520 = vmatprep.subr.mxu0 0.0
    %521 = vmatpush1.xpose.msra.mxu0 0.0
    %522 = vmatprep.subr.mxu0 0.0
    %523 = vmatpush1.xpose.msra.mxu0 0.0
    %524 = vmatprep.subr.mxu0 0.0
    %525 = vmatpush1.xpose.msra.mxu0 0.0
    %526 = vmatprep.subr.mxu0 0.0
    %527 = vmatpush1.xpose.msra.mxu0 0.0
    %528 = vmatprep.subr.mxu0 0.0
    %529 = vmatpush1.xpose.msra.mxu0 0.0
    %530 = vmatprep.subr.mxu0 0.0
    %531 = vmatpush1.xpose.msra.mxu0 0.0
    %532 = vmatprep.subr.mxu0 0.0
    %533 = vmatpush1.xpose.msra.mxu0 %v500
    %534 = vmatprep.subr.mxu0 0.0
    %535 = vmatpush2.xpose.msra.mxu0 0.0
    %536 = vmatprep.subr.mxu0 0.0
    %537 = vmatpush2.xpose.msra.mxu0 0.0
    %538 = vmatprep.subr.mxu0 0.0
    %539 = vmatpush2.xpose.msra.mxu0 0.0
    %540 = vmatprep.subr.mxu0 0.0
    %541 = vmatpush2.xpose.msra.mxu0 0.0
    %542 = vmatprep.subr.mxu0 0.0
    %543 = vmatpush2.xpose.msra.mxu0 0.0
    %544 = vmatprep.subr.mxu0 0.0
    %545 = vmatpush2.xpose.msra.mxu0 0.0
    %546 = vmatprep.subr.mxu0 0.0
    %547 = vmatpush2.xpose.msra.mxu0 0.0
    %548 = vmatprep.subr.mxu0 0.0
    %549 = vmatpush2.xpose.msra.mxu0 0.0
    %550 = vmatprep.subr.mxu0 0.0
    %551 = vmatpush2.xpose.msra.mxu0 0.0
    %552 = vmatprep.subr.mxu0 0.0
    %553 = vmatpush2.xpose.msra.mxu0 0.0
    %554 = vmatprep.subr.mxu0 0.0
    %555 = vmatpush2.xpose.msra.mxu0 0.0
    %556 = vmatprep.subr.mxu0 0.0
    %557 = vmatpush2.xpose.msra.mxu0 0.0
    %558 = vmatprep.subr.mxu0 0.0
    %559 = vmatpush2.xpose.msra.mxu0 0.0
    %560 = vmatprep.subr.mxu0 0.0
    %561 = vmatpush2.xpose.msra.mxu0 0.0
    %562 = vmatprep.subr.mxu0 0.0
    %563 = vmatpush2.xpose.msra.mxu0 0.0
    %564 = vmatprep.subr.mxu0 0.0
    %565 = vmatpush2.xpose.msra.mxu0 0.0
    %566 = vmatprep.mubr.f32.mxu0 0.0
    %567 = vmatmul.mubr.f32.gmra.mxu0 %v497
    %v568 = vpop.f32.mrf.mxu0
    %v569 = vadd.f32 0.0, %v568
    %v570 = vpop.f32.mrf.mxu0
    %571 = vdwg.mxu0
    %572 = vrot.lane.b32.xlu0 %v233, 120
    %v573 = vpop.permute.xlu0 %572
    %574 = vrot.lane.b32.xlu0 %v319, 120
    %v575 = vpop.permute.xlu0 %574
    %v576 = vsel %vm419, %v573, 0
    %v578 = vsel %vm419, %v575, 0
    %580 = vmatprep.subr.mxu0 0.0
    %581 = vmatpush1.xpose.msra.mxu0 0.0
    %582 = vmatprep.subr.mxu0 0.0
    %583 = vmatpush1.xpose.msra.mxu0 0.0
    %584 = vmatprep.subr.mxu0 0.0
    %585 = vmatpush1.xpose.msra.mxu0 0.0
    %586 = vmatprep.subr.mxu0 0.0
    %587 = vmatpush1.xpose.msra.mxu0 0.0
    %588 = vmatprep.subr.mxu0 0.0
    %589 = vmatpush1.xpose.msra.mxu0 0.0
    %590 = vmatprep.subr.mxu0 0.0
    %591 = vmatpush1.xpose.msra.mxu0 0.0
    %592 = vmatprep.subr.mxu0 0.0
    %593 = vmatpush1.xpose.msra.mxu0 0.0
    %594 = vmatprep.subr.mxu0 0.0
    %595 = vmatpush1.xpose.msra.mxu0 0.0
    %596 = vmatprep.subr.mxu0 0.0
    %597 = vmatpush1.xpose.msra.mxu0 0.0
    %598 = vmatprep.subr.mxu0 0.0
    %599 = vmatpush1.xpose.msra.mxu0 0.0
    %600 = vmatprep.subr.mxu0 0.0
    %601 = vmatpush1.xpose.msra.mxu0 0.0
    %602 = vmatprep.subr.mxu0 0.0
    %603 = vmatpush1.xpose.msra.mxu0 0.0
    %604 = vmatprep.subr.mxu0 0.0
    %605 = vmatpush1.xpose.msra.mxu0 0.0
    %606 = vmatprep.subr.mxu0 0.0
    %607 = vmatpush1.xpose.msra.mxu0 0.0
    %608 = vmatprep.subr.mxu0 0.0
    %609 = vmatpush1.xpose.msra.mxu0 0.0
    %610 = vmatprep.subr.mxu0 0.0
    %611 = vmatpush1.xpose.msra.mxu0 %v578
    %612 = vmatprep.subr.mxu0 0.0
    %613 = vmatpush2.xpose.msra.mxu0 0.0
    %614 = vmatprep.subr.mxu0 0.0
    %615 = vmatpush2.xpose.msra.mxu0 0.0
    %616 = vmatprep.subr.mxu0 0.0
    %617 = vmatpush2.xpose.msra.mxu0 0.0
    %618 = vmatprep.subr.mxu0 0.0
    %619 = vmatpush2.xpose.msra.mxu0 0.0
    %620 = vmatprep.subr.mxu0 0.0
    %621 = vmatpush2.xpose.msra.mxu0 0.0
    %622 = vmatprep.subr.mxu0 0.0
    %623 = vmatpush2.xpose.msra.mxu0 0.0
    %624 = vmatprep.subr.mxu0 0.0
    %625 = vmatpush2.xpose.msra.mxu0 0.0
    %626 = vmatprep.subr.mxu0 0.0
    %627 = vmatpush2.xpose.msra.mxu0 0.0
    %628 = vmatprep.subr.mxu0 0.0
    %629 = vmatpush2.xpose.msra.mxu0 0.0
    %630 = vmatprep.subr.mxu0 0.0
    %631 = vmatpush2.xpose.msra.mxu0 0.0
    %632 = vmatprep.subr.mxu0 0.0
    %633 = vmatpush2.xpose.msra.mxu0 0.0
    %634 = vmatprep.subr.mxu0 0.0
    %635 = vmatpush2.xpose.msra.mxu0 0.0
    %636 = vmatprep.subr.mxu0 0.0
    %637 = vmatpush2.xpose.msra.mxu0 0.0
    %638 = vmatprep.subr.mxu0 0.0
    %639 = vmatpush2.xpose.msra.mxu0 0.0
    %640 = vmatprep.subr.mxu0 0.0
    %641 = vmatpush2.xpose.msra.mxu0 0.0
    %642 = vmatprep.subr.mxu0 0.0
    %643 = vmatpush2.xpose.msra.mxu0 0.0
    %644 = vmatprep.mubr.f32.mxu0 0.0
    %645 = vmatmul.mubr.f32.gmra.mxu0 %v576
    %v646 = vpop.f32.mrf.mxu0
    %v647 = vadd.f32 0.0, %v646
    %v648 = vpop.f32.mrf.mxu0
    %649 = vdwg.mxu0
    %650 = vrot.lane.b32.xlu0 %v234, 120
    %v651 = vpop.permute.xlu0 %650
    %652 = vrot.lane.b32.xlu0 %v324, 120
    %v653 = vpop.permute.xlu0 %652
    %v654 = vsel %vm419, %v651, 0
    %v656 = vsel %vm419, %v653, 0
    %658 = vmatprep.subr.mxu0 0.0
    %659 = vmatpush1.xpose.msra.mxu0 0.0
    %660 = vmatprep.subr.mxu0 0.0
    %661 = vmatpush1.xpose.msra.mxu0 0.0
    %662 = vmatprep.subr.mxu0 0.0
    %663 = vmatpush1.xpose.msra.mxu0 0.0
    %664 = vmatprep.subr.mxu0 0.0
    %665 = vmatpush1.xpose.msra.mxu0 0.0
    %666 = vmatprep.subr.mxu0 0.0
    %667 = vmatpush1.xpose.msra.mxu0 0.0
    %668 = vmatprep.subr.mxu0 0.0
    %669 = vmatpush1.xpose.msra.mxu0 0.0
    %670 = vmatprep.subr.mxu0 0.0
    %671 = vmatpush1.xpose.msra.mxu0 0.0
    %672 = vmatprep.subr.mxu0 0.0
    %673 = vmatpush1.xpose.msra.mxu0 0.0
    %674 = vmatprep.subr.mxu0 0.0
    %675 = vmatpush1.xpose.msra.mxu0 0.0
    %676 = vmatprep.subr.mxu0 0.0
    %677 = vmatpush1.xpose.msra.mxu0 0.0
    %678 = vmatprep.subr.mxu0 0.0
    %679 = vmatpush1.xpose.msra.mxu0 0.0
    %680 = vmatprep.subr.mxu0 0.0
    %681 = vmatpush1.xpose.msra.mxu0 0.0
    %682 = vmatprep.subr.mxu0 0.0
    %683 = vmatpush1.xpose.msra.mxu0 0.0
    %684 = vmatprep.subr.mxu0 0.0
    %685 = vmatpush1.xpose.msra.mxu0 0.0
    %686 = vmatprep.subr.mxu0 0.0
    %687 = vmatpush1.xpose.msra.mxu0 0.0
    %688 = vmatprep.subr.mxu0 0.0
    %689 = vmatpush1.xpose.msra.mxu0 %v656
    %690 = vmatprep.subr.mxu0 0.0
    %691 = vmatpush2.xpose.msra.mxu0 0.0
    %692 = vmatprep.subr.mxu0 0.0
    %693 = vmatpush2.xpose.msra.mxu0 0.0
    %694 = vmatprep.subr.mxu0 0.0
    %695 = vmatpush2.xpose.msra.mxu0 0.0
    %696 = vmatprep.subr.mxu0 0.0
    %697 = vmatpush2.xpose.msra.mxu0 0.0
    %698 = vmatprep.subr.mxu0 0.0
    %699 = vmatpush2.xpose.msra.mxu0 0.0
    %700 = vmatprep.subr.mxu0 0.0
    %701 = vmatpush2.xpose.msra.mxu0 0.0
    %702 = vmatprep.subr.mxu0 0.0
    %703 = vmatpush2.xpose.msra.mxu0 0.0
    %704 = vmatprep.subr.mxu0 0.0
    %705 = vmatpush2.xpose.msra.mxu0 0.0
    %706 = vmatprep.subr.mxu0 0.0
    %707 = vmatpush2.xpose.msra.mxu0 0.0
    %708 = vmatprep.subr.mxu0 0.0
    %709 = vmatpush2.xpose.msra.mxu0 0.0
    %710 = vmatprep.subr.mxu0 0.0
    %711 = vmatpush2.xpose.msra.mxu0 0.0
    %712 = vmatprep.subr.mxu0 0.0
    %713 = vmatpush2.xpose.msra.mxu0 0.0
    %714 = vmatprep.subr.mxu0 0.0
    %715 = vmatpush2.xpose.msra.mxu0 0.0
    %716 = vmatprep.subr.mxu0 0.0
    %717 = vmatpush2.xpose.msra.mxu0 0.0
    %718 = vmatprep.subr.mxu0 0.0
    %719 = vmatpush2.xpose.msra.mxu0 0.0
    %720 = vmatprep.subr.mxu0 0.0
    %721 = vmatpush2.xpose.msra.mxu0 0.0
    %722 = vmatprep.mubr.f32.mxu0 0.0
    %723 = vmatmul.mubr.f32.gmra.mxu0 %v654
    %v724 = vpop.f32.mrf.mxu0
    %v725 = vadd.f32 0.0, %v724
    %v726 = vpop.f32.mrf.mxu0
    %727 = vdwg.mxu0
    %728 = vrot.lane.b32.xlu0 %v233, 112
    %v729 = vpop.permute.xlu0 %728
    %730 = vrot.lane.b32.xlu0 %v319, 112
    %v731 = vpop.permute.xlu0 %730
    %v732 = vsel %vm419, %v729, 0
    %v734 = vsel %vm419, %v731, 0
    %736 = vmatprep.subr.mxu0 0.0
    %737 = vmatpush1.xpose.msra.mxu0 0.0
    %738 = vmatprep.subr.mxu0 0.0
    %739 = vmatpush1.xpose.msra.mxu0 0.0
    %740 = vmatprep.subr.mxu0 0.0
    %741 = vmatpush1.xpose.msra.mxu0 0.0
    %742 = vmatprep.subr.mxu0 0.0
    %743 = vmatpush1.xpose.msra.mxu0 0.0
    %744 = vmatprep.subr.mxu0 0.0
    %745 = vmatpush1.xpose.msra.mxu0 0.0
    %746 = vmatprep.subr.mxu0 0.0
    %747 = vmatpush1.xpose.msra.mxu0 0.0
    %748 = vmatprep.subr.mxu0 0.0
    %749 = vmatpush1.xpose.msra.mxu0 0.0
    %750 = vmatprep.subr.mxu0 0.0
    %751 = vmatpush1.xpose.msra.mxu0 0.0
    %752 = vmatprep.subr.mxu0 0.0
    %753 = vmatpush1.xpose.msra.mxu0 0.0
    %754 = vmatprep.subr.mxu0 0.0
    %755 = vmatpush1.xpose.msra.mxu0 0.0
    %756 = vmatprep.subr.mxu0 0.0
    %757 = vmatpush1.xpose.msra.mxu0 0.0
    %758 = vmatprep.subr.mxu0 0.0
    %759 = vmatpush1.xpose.msra.mxu0 0.0
    %760 = vmatprep.subr.mxu0 0.0
    %761 = vmatpush1.xpose.msra.mxu0 0.0
    %762 = vmatprep.subr.mxu0 0.0
    %763 = vmatpush1.xpose.msra.mxu0 0.0
    %764 = vmatprep.subr.mxu0 0.0
    %765 = vmatpush1.xpose.msra.mxu0 0.0
    %766 = vmatprep.subr.mxu0 0.0
    %767 = vmatpush1.xpose.msra.mxu0 %v734
    %768 = vmatprep.subr.mxu0 0.0
    %769 = vmatpush2.xpose.msra.mxu0 0.0
    %770 = vmatprep.subr.mxu0 0.0
    %771 = vmatpush2.xpose.msra.mxu0 0.0
    %772 = vmatprep.subr.mxu0 0.0
    %773 = vmatpush2.xpose.msra.mxu0 0.0
    %774 = vmatprep.subr.mxu0 0.0
    %775 = vmatpush2.xpose.msra.mxu0 0.0
    %776 = vmatprep.subr.mxu0 0.0
    %777 = vmatpush2.xpose.msra.mxu0 0.0
    %778 = vmatprep.subr.mxu0 0.0
    %779 = vmatpush2.xpose.msra.mxu0 0.0
    %780 = vmatprep.subr.mxu0 0.0
    %781 = vmatpush2.xpose.msra.mxu0 0.0
    %782 = vmatprep.subr.mxu0 0.0
    %783 = vmatpush2.xpose.msra.mxu0 0.0
    %784 = vmatprep.subr.mxu0 0.0
    %785 = vmatpush2.xpose.msra.mxu0 0.0
    %786 = vmatprep.subr.mxu0 0.0
    %787 = vmatpush2.xpose.msra.mxu0 0.0
    %788 = vmatprep.subr.mxu0 0.0
    %789 = vmatpush2.xpose.msra.mxu0 0.0
    %790 = vmatprep.subr.mxu0 0.0
    %791 = vmatpush2.xpose.msra.mxu0 0.0
    %792 = vmatprep.subr.mxu0 0.0
    %793 = vmatpush2.xpose.msra.mxu0 0.0
    %794 = vmatprep.subr.mxu0 0.0
    %795 = vmatpush2.xpose.msra.mxu0 0.0
    %796 = vmatprep.subr.mxu0 0.0
    %797 = vmatpush2.xpose.msra.mxu0 0.0
    %798 = vmatprep.subr.mxu0 0.0
    %799 = vmatpush2.xpose.msra.mxu0 0.0
    %800 = vmatprep.mubr.f32.mxu0 0.0
    %801 = vmatmul.mubr.f32.gmra.mxu0 %v732
    %v802 = vpop.f32.mrf.mxu0
    %v803 = vadd.f32 0.0, %v802
    %v804 = vpop.f32.mrf.mxu0
    %805 = vdwg.mxu0
    %806 = vrot.lane.b32.xlu0 %v234, 112
    %v807 = vpop.permute.xlu0 %806
    %808 = vrot.lane.b32.xlu0 %v324, 112
    %v809 = vpop.permute.xlu0 %808
    %v810 = vsel %vm419, %v807, 0
    %v812 = vsel %vm419, %v809, 0
    %814 = vmatprep.subr.mxu0 0.0
    %815 = vmatpush1.xpose.msra.mxu0 0.0
    %816 = vmatprep.subr.mxu0 0.0
    %817 = vmatpush1.xpose.msra.mxu0 0.0
    %818 = vmatprep.subr.mxu0 0.0
    %819 = vmatpush1.xpose.msra.mxu0 0.0
    %820 = vmatprep.subr.mxu0 0.0
    %821 = vmatpush1.xpose.msra.mxu0 0.0
    %822 = vmatprep.subr.mxu0 0.0
    %823 = vmatpush1.xpose.msra.mxu0 0.0
    %824 = vmatprep.subr.mxu0 0.0
    %825 = vmatpush1.xpose.msra.mxu0 0.0
    %826 = vmatprep.subr.mxu0 0.0
    %827 = vmatpush1.xpose.msra.mxu0 0.0
    %828 = vmatprep.subr.mxu0 0.0
    %829 = vmatpush1.xpose.msra.mxu0 0.0
    %830 = vmatprep.subr.mxu0 0.0
    %831 = vmatpush1.xpose.msra.mxu0 0.0
    %832 = vmatprep.subr.mxu0 0.0
    %833 = vmatpush1.xpose.msra.mxu0 0.0
    %834 = vmatprep.subr.mxu0 0.0
    %835 = vmatpush1.xpose.msra.mxu0 0.0
    %836 = vmatprep.subr.mxu0 0.0
    %837 = vmatpush1.xpose.msra.mxu0 0.0
    %838 = vmatprep.subr.mxu0 0.0
    %839 = vmatpush1.xpose.msra.mxu0 0.0
    %840 = vmatprep.subr.mxu0 0.0
    %841 = vmatpush1.xpose.msra.mxu0 0.0
    %842 = vmatprep.subr.mxu0 0.0
    %843 = vmatpush1.xpose.msra.mxu0 0.0
    %844 = vmatprep.subr.mxu0 0.0
    %845 = vmatpush1.xpose.msra.mxu0 %v812
    %846 = vmatprep.subr.mxu0 0.0
    %847 = vmatpush2.xpose.msra.mxu0 0.0
    %848 = vmatprep.subr.mxu0 0.0
    %849 = vmatpush2.xpose.msra.mxu0 0.0
    %850 = vmatprep.subr.mxu0 0.0
    %851 = vmatpush2.xpose.msra.mxu0 0.0
    %852 = vmatprep.subr.mxu0 0.0
    %853 = vmatpush2.xpose.msra.mxu0 0.0
    %854 = vmatprep.subr.mxu0 0.0
    %855 = vmatpush2.xpose.msra.mxu0 0.0
    %856 = vmatprep.subr.mxu0 0.0
    %857 = vmatpush2.xpose.msra.mxu0 0.0
    %858 = vmatprep.subr.mxu0 0.0
    %859 = vmatpush2.xpose.msra.mxu0 0.0
    %860 = vmatprep.subr.mxu0 0.0
    %861 = vmatpush2.xpose.msra.mxu0 0.0
    %862 = vmatprep.subr.mxu0 0.0
    %863 = vmatpush2.xpose.msra.mxu0 0.0
    %864 = vmatprep.subr.mxu0 0.0
    %865 = vmatpush2.xpose.msra.mxu0 0.0
    %866 = vmatprep.subr.mxu0 0.0
    %867 = vmatpush2.xpose.msra.mxu0 0.0
    %868 = vmatprep.subr.mxu0 0.0
    %869 = vmatpush2.xpose.msra.mxu0 0.0
    %870 = vmatprep.subr.mxu0 0.0
    %871 = vmatpush2.xpose.msra.mxu0 0.0
    %872 = vmatprep.subr.mxu0 0.0
    %873 = vmatpush2.xpose.msra.mxu0 0.0
    %874 = vmatprep.subr.mxu0 0.0
    %875 = vmatpush2.xpose.msra.mxu0 0.0
    %876 = vmatprep.subr.mxu0 0.0
    %877 = vmatpush2.xpose.msra.mxu0 0.0
    %878 = vmatprep.mubr.f32.mxu0 0.0
    %879 = vmatmul.mubr.f32.gmra.mxu0 %v810
    %v880 = vpop.f32.mrf.mxu0
    %v881 = vadd.f32 0.0, %v880
    %v882 = vpop.f32.mrf.mxu0
    %883 = vdwg.mxu0
    %884 = vrot.lane.b32.xlu0 %v233, 104
    %v885 = vpop.permute.xlu0 %884
    %886 = vrot.lane.b32.xlu0 %v319, 104
    %v887 = vpop.permute.xlu0 %886
    %v888 = vsel %vm419, %v885, 0
    %v890 = vsel %vm419, %v887, 0
    %892 = vmatprep.subr.mxu0 0.0
    %893 = vmatpush1.xpose.msra.mxu0 0.0
    %894 = vmatprep.subr.mxu0 0.0
    %895 = vmatpush1.xpose.msra.mxu0 0.0
    %896 = vmatprep.subr.mxu0 0.0
    %897 = vmatpush1.xpose.msra.mxu0 0.0
    %898 = vmatprep.subr.mxu0 0.0
    %899 = vmatpush1.xpose.msra.mxu0 0.0
    %900 = vmatprep.subr.mxu0 0.0
    %901 = vmatpush1.xpose.msra.mxu0 0.0
    %902 = vmatprep.subr.mxu0 0.0
    %903 = vmatpush1.xpose.msra.mxu0 0.0
    %904 = vmatprep.subr.mxu0 0.0
    %905 = vmatpush1.xpose.msra.mxu0 0.0
    %906 = vmatprep.subr.mxu0 0.0
    %907 = vmatpush1.xpose.msra.mxu0 0.0
    %908 = vmatprep.subr.mxu0 0.0
    %909 = vmatpush1.xpose.msra.mxu0 0.0
    %910 = vmatprep.subr.mxu0 0.0
    %911 = vmatpush1.xpose.msra.mxu0 0.0
    %912 = vmatprep.subr.mxu0 0.0
    %913 = vmatpush1.xpose.msra.mxu0 0.0
    %914 = vmatprep.subr.mxu0 0.0
    %915 = vmatpush1.xpose.msra.mxu0 0.0
    %916 = vmatprep.subr.mxu0 0.0
    %917 = vmatpush1.xpose.msra.mxu0 0.0
    %918 = vmatprep.subr.mxu0 0.0
    %919 = vmatpush1.xpose.msra.mxu0 0.0
    %920 = vmatprep.subr.mxu0 0.0
    %921 = vmatpush1.xpose.msra.mxu0 0.0
    %922 = vmatprep.subr.mxu0 0.0
    %923 = vmatpush1.xpose.msra.mxu0 %v890
    %924 = vmatprep.subr.mxu0 0.0
    %925 = vmatpush2.xpose.msra.mxu0 0.0
    %926 = vmatprep.subr.mxu0 0.0
    %927 = vmatpush2.xpose.msra.mxu0 0.0
    %928 = vmatprep.subr.mxu0 0.0
    %929 = vmatpush2.xpose.msra.mxu0 0.0
    %930 = vmatprep.subr.mxu0 0.0
    %931 = vmatpush2.xpose.msra.mxu0 0.0
    %932 = vmatprep.subr.mxu0 0.0
    %933 = vmatpush2.xpose.msra.mxu0 0.0
    %934 = vmatprep.subr.mxu0 0.0
    %935 = vmatpush2.xpose.msra.mxu0 0.0
    %936 = vmatprep.subr.mxu0 0.0
    %937 = vmatpush2.xpose.msra.mxu0 0.0
    %938 = vmatprep.subr.mxu0 0.0
    %939 = vmatpush2.xpose.msra.mxu0 0.0
    %940 = vmatprep.subr.mxu0 0.0
    %941 = vmatpush2.xpose.msra.mxu0 0.0
    %942 = vmatprep.subr.mxu0 0.0
    %943 = vmatpush2.xpose.msra.mxu0 0.0
    %944 = vmatprep.subr.mxu0 0.0
    %945 = vmatpush2.xpose.msra.mxu0 0.0
    %946 = vmatprep.subr.mxu0 0.0
    %947 = vmatpush2.xpose.msra.mxu0 0.0
    %948 = vmatprep.subr.mxu0 0.0
    %949 = vmatpush2.xpose.msra.mxu0 0.0
    %950 = vmatprep.subr.mxu0 0.0
    %951 = vmatpush2.xpose.msra.mxu0 0.0
    %952 = vmatprep.subr.mxu0 0.0
    %953 = vmatpush2.xpose.msra.mxu0 0.0
    %954 = vmatprep.subr.mxu0 0.0
    %955 = vmatpush2.xpose.msra.mxu0 0.0
    %956 = vmatprep.mubr.f32.mxu0 0.0
    %957 = vmatmul.mubr.f32.gmra.mxu0 %v888
    %v958 = vpop.f32.mrf.mxu0
    %v959 = vadd.f32 0.0, %v958
    %v960 = vpop.f32.mrf.mxu0
    %961 = vdwg.mxu0
    %962 = vrot.lane.b32.xlu0 %v234, 104
    %v963 = vpop.permute.xlu0 %962
    %964 = vrot.lane.b32.xlu0 %v324, 104
    %v965 = vpop.permute.xlu0 %964
    %v966 = vsel %vm419, %v963, 0
    %v968 = vsel %vm419, %v965, 0
    %970 = vmatprep.subr.mxu0 0.0
    %971 = vmatpush1.xpose.msra.mxu0 0.0
    %972 = vmatprep.subr.mxu0 0.0
    %973 = vmatpush1.xpose.msra.mxu0 0.0
    %974 = vmatprep.subr.mxu0 0.0
    %975 = vmatpush1.xpose.msra.mxu0 0.0
    %976 = vmatprep.subr.mxu0 0.0
    %977 = vmatpush1.xpose.msra.mxu0 0.0
    %978 = vmatprep.subr.mxu0 0.0
    %979 = vmatpush1.xpose.msra.mxu0 0.0
    %980 = vmatprep.subr.mxu0 0.0
    %981 = vmatpush1.xpose.msra.mxu0 0.0
    %982 = vmatprep.subr.mxu0 0.0
    %983 = vmatpush1.xpose.msra.mxu0 0.0
    %984 = vmatprep.subr.mxu0 0.0
    %985 = vmatpush1.xpose.msra.mxu0 0.0
    %986 = vmatprep.subr.mxu0 0.0
    %987 = vmatpush1.xpose.msra.mxu0 0.0
    %988 = vmatprep.subr.mxu0 0.0
    %989 = vmatpush1.xpose.msra.mxu0 0.0
    %990 = vmatprep.subr.mxu0 0.0
    %991 = vmatpush1.xpose.msra.mxu0 0.0
    %992 = vmatprep.subr.mxu0 0.0
    %993 = vmatpush1.xpose.msra.mxu0 0.0
    %994 = vmatprep.subr.mxu0 0.0
    %995 = vmatpush1.xpose.msra.mxu0 0.0
    %996 = vmatprep.subr.mxu0 0.0
    %997 = vmatpush1.xpose.msra.mxu0 0.0
    %998 = vmatprep.subr.mxu0 0.0
    %999 = vmatpush1.xpose.msra.mxu0 0.0
    %1000 = vmatprep.subr.mxu0 0.0
    %1001 = vmatpush1.xpose.msra.mxu0 %v968
    %1002 = vmatprep.subr.mxu0 0.0
    %1003 = vmatpush2.xpose.msra.mxu0 0.0
    %1004 = vmatprep.subr.mxu0 0.0
    %1005 = vmatpush2.xpose.msra.mxu0 0.0
    %1006 = vmatprep.subr.mxu0 0.0
    %1007 = vmatpush2.xpose.msra.mxu0 0.0
    %1008 = vmatprep.subr.mxu0 0.0
    %1009 = vmatpush2.xpose.msra.mxu0 0.0
    %1010 = vmatprep.subr.mxu0 0.0
    %1011 = vmatpush2.xpose.msra.mxu0 0.0
    %1012 = vmatprep.subr.mxu0 0.0
    %1013 = vmatpush2.xpose.msra.mxu0 0.0
    %1014 = vmatprep.subr.mxu0 0.0
    %1015 = vmatpush2.xpose.msra.mxu0 0.0
    %1016 = vmatprep.subr.mxu0 0.0
    %1017 = vmatpush2.xpose.msra.mxu0 0.0
    %1018 = vmatprep.subr.mxu0 0.0
    %1019 = vmatpush2.xpose.msra.mxu0 0.0
    %1020 = vmatprep.subr.mxu0 0.0
    %1021 = vmatpush2.xpose.msra.mxu0 0.0
    %1022 = vmatprep.subr.mxu0 0.0
    %1023 = vmatpush2.xpose.msra.mxu0 0.0
    %1024 = vmatprep.subr.mxu0 0.0
    %1025 = vmatpush2.xpose.msra.mxu0 0.0
    %1026 = vmatprep.subr.mxu0 0.0
    %1027 = vmatpush2.xpose.msra.mxu0 0.0
    %1028 = vmatprep.subr.mxu0 0.0
    %1029 = vmatpush2.xpose.msra.mxu0 0.0
    %1030 = vmatprep.subr.mxu0 0.0
    %1031 = vmatpush2.xpose.msra.mxu0 0.0
    %1032 = vmatprep.subr.mxu0 0.0
    %1033 = vmatpush2.xpose.msra.mxu0 0.0
    %1034 = vmatprep.mubr.f32.mxu0 0.0
    %1035 = vmatmul.mubr.f32.gmra.mxu0 %v966
    %v1036 = vpop.f32.mrf.mxu0
    %v1037 = vadd.f32 0.0, %v1036
    %v1038 = vpop.f32.mrf.mxu0
    %1039 = vdwg.mxu0
    %v1040 = vsel %vm419, %v493, -inf
    %v1041 = vsel %vm419, %v647, -inf
    %v1042 = vsel %vm419, %v803, -inf
    %v1043 = vmax.f32 %v1040, %v1042
    %v1044 = vsel %vm419, %v959, -inf
    %v1045 = vmax.f32 %v1041, %v1044
    %v1046 = vmax.f32 %v1043, %v1045
    %v1047 = vsel %vm419, %v569, -inf
    %v1048 = vsel %vm419, %v725, -inf
    %v1049 = vsel %vm419, %v881, -inf
    %v1050 = vmax.f32 %v1047, %v1049
    %v1051 = vsel %vm419, %v1037, -inf
    %v1052 = vmax.f32 %v1048, %v1051
    %v1053 = vmax.f32 %v1050, %v1052
    %v1054 = vsub.f32 %v493, %v1046
    %v1055 = vsub.f32 %v569, %v1053
    %v1056 = vsub.f32 %v647, %v1046
    %v1057 = vsub.f32 %v725, %v1053
    %v1058 = vsub.f32 %v803, %v1046
    %v1059 = vsub.f32 %v881, %v1053
    %v1060 = vsub.f32 %v959, %v1046
    %v1061 = vsub.f32 %v1037, %v1053
    %v1062 = vmul.f32 %v1054, 1.442695
    %v1063 = vpow.pop %v1062
    %v1064 = vmul.f32 %v1055, 1.442695
    %v1065 = vpow.pop %v1064
    %v1066 = vmul.f32 %v1056, 1.442695
    %v1067 = vpow.pop %v1066
    %v1068 = vmul.f32 %v1057, 1.442695
    %v1069 = vpow.pop %v1068
    %v1070 = vmul.f32 %v1058, 1.442695
    %v1071 = vpow.pop %v1070
    %v1072 = vmul.f32 %v1059, 1.442695
    %v1073 = vpow.pop %v1072
    %v1074 = vmul.f32 %v1060, 1.442695
    %v1075 = vpow.pop %v1074
    %v1076 = vmul.f32 %v1061, 1.442695
    %v1077 = vpow.pop %v1076
    %v1078 = vsel %vm419, %v1063, 0.0
    %v1079 = vsel %vm419, %v1067, 0.0
    %v1080 = vadd.f32 %v1078, %v1079
    %v1081 = vsel %vm419, %v1071, 0.0
    %v1082 = vadd.f32 %v1080, %v1081
    %v1083 = vsel %vm419, %v1075, 0.0
    %v1084 = vadd.f32 %v1082, %v1083
    %v1085 = vsel %vm419, %v1065, 0.0
    %v1086 = vsel %vm419, %v1069, 0.0
    %v1087 = vadd.f32 %v1085, %v1086
    %v1088 = vsel %vm419, %v1073, 0.0
    %v1089 = vadd.f32 %v1087, %v1088
    %v1090 = vsel %vm419, %v1077, 0.0
    %v1091 = vadd.f32 %v1089, %v1090
    %v1092 = vrcp.pop %v1084
    %v1093 = vrcp.pop %v1091
    %v1094 = vmul.f32 %v1063, %v1092
    %v1095 = vmul.f32 %v1065, %v1093
    %v1096 = vmul.f32 %v1067, %v1092
    %v1097 = vmul.f32 %v1069, %v1093
    %v1098 = vmul.f32 %v1071, %v1092
    %v1099 = vmul.f32 %v1073, %v1093
    %v1100 = vmul.f32 %v1075, %v1092
    %v1101 = vmul.f32 %v1077, %v1093
    %v1103 = vsel %vm419, %v1094, 0
    %1105 = vmatprep.subr.mxu0 0.0
    %1106 = vmatpush1.msra.mxu0 0.0
    %1107 = vmatprep.subr.mxu0 0.0
    %1108 = vmatpush1.msra.mxu0 0.0
    %1109 = vmatprep.subr.mxu0 0.0
    %1110 = vmatpush1.msra.mxu0 0.0
    %1111 = vmatprep.subr.mxu0 0.0
    %1112 = vmatpush1.msra.mxu0 0.0
    %1113 = vmatprep.subr.mxu0 0.0
    %1114 = vmatpush1.msra.mxu0 0.0
    %1115 = vmatprep.subr.mxu0 0.0
    %1116 = vmatpush1.msra.mxu0 0.0
    %1117 = vmatprep.subr.mxu0 0.0
    %1118 = vmatpush1.msra.mxu0 0.0
    %1119 = vmatprep.subr.mxu0 0.0
    %1120 = vmatpush1.msra.mxu0 0.0
    %1121 = vmatprep.subr.mxu0 0.0
    %1122 = vmatpush1.msra.mxu0 0.0
    %1123 = vmatprep.subr.mxu0 0.0
    %1124 = vmatpush1.msra.mxu0 0.0
    %1125 = vmatprep.subr.mxu0 0.0
    %1126 = vmatpush1.msra.mxu0 0.0
    %1127 = vmatprep.subr.mxu0 0.0
    %1128 = vmatpush1.msra.mxu0 0.0
    %1129 = vmatprep.subr.mxu0 0.0
    %1130 = vmatpush1.msra.mxu0 0.0
    %1131 = vmatprep.subr.mxu0 0.0
    %1132 = vmatpush1.msra.mxu0 0.0
    %1133 = vmatprep.subr.mxu0 0.0
    %1134 = vmatpush1.msra.mxu0 0.0
    %1135 = vmatprep.subr.mxu0 0.0
    %1136 = vmatpush1.msra.mxu0 %v411
    %1137 = vmatprep.subr.mxu0 0.0
    %1138 = vmatpush2.msra.mxu0 0.0
    %1139 = vmatprep.subr.mxu0 0.0
    %1140 = vmatpush2.msra.mxu0 0.0
    %1141 = vmatprep.subr.mxu0 0.0
    %1142 = vmatpush2.msra.mxu0 0.0
    %1143 = vmatprep.subr.mxu0 0.0
    %1144 = vmatpush2.msra.mxu0 0.0
    %1145 = vmatprep.subr.mxu0 0.0
    %1146 = vmatpush2.msra.mxu0 0.0
    %1147 = vmatprep.subr.mxu0 0.0
    %1148 = vmatpush2.msra.mxu0 0.0
    %1149 = vmatprep.subr.mxu0 0.0
    %1150 = vmatpush2.msra.mxu0 0.0
    %1151 = vmatprep.subr.mxu0 0.0
    %1152 = vmatpush2.msra.mxu0 0.0
    %1153 = vmatprep.subr.mxu0 0.0
    %1154 = vmatpush2.msra.mxu0 0.0
    %1155 = vmatprep.subr.mxu0 0.0
    %1156 = vmatpush2.msra.mxu0 0.0
    %1157 = vmatprep.subr.mxu0 0.0
    %1158 = vmatpush2.msra.mxu0 0.0
    %1159 = vmatprep.subr.mxu0 0.0
    %1160 = vmatpush2.msra.mxu0 0.0
    %1161 = vmatprep.subr.mxu0 0.0
    %1162 = vmatpush2.msra.mxu0 0.0
    %1163 = vmatprep.subr.mxu0 0.0
    %1164 = vmatpush2.msra.mxu0 0.0
    %1165 = vmatprep.subr.mxu0 0.0
    %1166 = vmatpush2.msra.mxu0 0.0
    %1167 = vmatprep.subr.mxu0 0.0
    %1168 = vmatpush2.msra.mxu0 0.0
    %1169 = vmatprep.mubr.f32.mxu0 0.0
    %1170 = vmatmul.mubr.f32.gmra.mxu0 %v1103
    %v1171 = vpop.f32.mrf.mxu0
    %v1172 = vadd.f32 0.0, %v1171
    %v1173 = vpop.f32.mrf.mxu0
    %1174 = vdwg.mxu0
    %v1176 = vsel %vm419, %v1095, 0
    %1178 = vmatprep.subr.mxu0 0.0
    %1179 = vmatpush1.msra.mxu0 0.0
    %1180 = vmatprep.subr.mxu0 0.0
    %1181 = vmatpush1.msra.mxu0 0.0
    %1182 = vmatprep.subr.mxu0 0.0
    %1183 = vmatpush1.msra.mxu0 0.0
    %1184 = vmatprep.subr.mxu0 0.0
    %1185 = vmatpush1.msra.mxu0 0.0
    %1186 = vmatprep.subr.mxu0 0.0
    %1187 = vmatpush1.msra.mxu0 0.0
    %1188 = vmatprep.subr.mxu0 0.0
    %1189 = vmatpush1.msra.mxu0 0.0
    %1190 = vmatprep.subr.mxu0 0.0
    %1191 = vmatpush1.msra.mxu0 0.0
    %1192 = vmatprep.subr.mxu0 0.0
    %1193 = vmatpush1.msra.mxu0 0.0
    %1194 = vmatprep.subr.mxu0 0.0
    %1195 = vmatpush1.msra.mxu0 0.0
    %1196 = vmatprep.subr.mxu0 0.0
    %1197 = vmatpush1.msra.mxu0 0.0
    %1198 = vmatprep.subr.mxu0 0.0
    %1199 = vmatpush1.msra.mxu0 0.0
    %1200 = vmatprep.subr.mxu0 0.0
    %1201 = vmatpush1.msra.mxu0 0.0
    %1202 = vmatprep.subr.mxu0 0.0
    %1203 = vmatpush1.msra.mxu0 0.0
    %1204 = vmatprep.subr.mxu0 0.0
    %1205 = vmatpush1.msra.mxu0 0.0
    %1206 = vmatprep.subr.mxu0 0.0
    %1207 = vmatpush1.msra.mxu0 0.0
    %1208 = vmatprep.subr.mxu0 0.0
    %1209 = vmatpush1.msra.mxu0 %v416
    %1210 = vmatprep.subr.mxu0 0.0
    %1211 = vmatpush2.msra.mxu0 0.0
    %1212 = vmatprep.subr.mxu0 0.0
    %1213 = vmatpush2.msra.mxu0 0.0
    %1214 = vmatprep.subr.mxu0 0.0
    %1215 = vmatpush2.msra.mxu0 0.0
    %1216 = vmatprep.subr.mxu0 0.0
    %1217 = vmatpush2.msra.mxu0 0.0
    %1218 = vmatprep.subr.mxu0 0.0
    %1219 = vmatpush2.msra.mxu0 0.0
    %1220 = vmatprep.subr.mxu0 0.0
    %1221 = vmatpush2.msra.mxu0 0.0
    %1222 = vmatprep.subr.mxu0 0.0
    %1223 = vmatpush2.msra.mxu0 0.0
    %1224 = vmatprep.subr.mxu0 0.0
    %1225 = vmatpush2.msra.mxu0 0.0
    %1226 = vmatprep.subr.mxu0 0.0
    %1227 = vmatpush2.msra.mxu0 0.0
    %1228 = vmatprep.subr.mxu0 0.0
    %1229 = vmatpush2.msra.mxu0 0.0
    %1230 = vmatprep.subr.mxu0 0.0
    %1231 = vmatpush2.msra.mxu0 0.0
    %1232 = vmatprep.subr.mxu0 0.0
    %1233 = vmatpush2.msra.mxu0 0.0
    %1234 = vmatprep.subr.mxu0 0.0
    %1235 = vmatpush2.msra.mxu0 0.0
    %1236 = vmatprep.subr.mxu0 0.0
    %1237 = vmatpush2.msra.mxu0 0.0
    %1238 = vmatprep.subr.mxu0 0.0
    %1239 = vmatpush2.msra.mxu0 0.0
    %1240 = vmatprep.subr.mxu0 0.0
    %1241 = vmatpush2.msra.mxu0 0.0
    %1242 = vmatprep.mubr.f32.mxu0 0.0
    %1243 = vmatmul.mubr.f32.gmra.mxu0 %v1176
    %v1244 = vpop.f32.mrf.mxu0
    %v1245 = vadd.f32 0.0, %v1244
    %v1246 = vpop.f32.mrf.mxu0
    %1247 = vdwg.mxu0
    %v1248 = vld [vmem:[#allocation13] sm:$0xff]
    %1250 = vrot.lane.b32.xlu0 %v411, 120
    %v1251 = vpop.permute.xlu0 %1250
    %v1254 = vsel %vm419, %v1096, 0
    %1256 = vmatprep.subr.mxu0 0.0
    %1257 = vmatpush1.msra.mxu0 0.0
    %1258 = vmatprep.subr.mxu0 0.0
    %1259 = vmatpush1.msra.mxu0 0.0
    %1260 = vmatprep.subr.mxu0 0.0
    %1261 = vmatpush1.msra.mxu0 0.0
    %1262 = vmatprep.subr.mxu0 0.0
    %1263 = vmatpush1.msra.mxu0 0.0
    %1264 = vmatprep.subr.mxu0 0.0
    %1265 = vmatpush1.msra.mxu0 0.0
    %1266 = vmatprep.subr.mxu0 0.0
    %1267 = vmatpush1.msra.mxu0 0.0
    %1268 = vmatprep.subr.mxu0 0.0
    %1269 = vmatpush1.msra.mxu0 0.0
    %1270 = vmatprep.subr.mxu0 0.0
    %1271 = vmatpush1.msra.mxu0 0.0
    %1272 = vmatprep.subr.mxu0 0.0
    %1273 = vmatpush1.msra.mxu0 0.0
    %1274 = vmatprep.subr.mxu0 0.0
    %1275 = vmatpush1.msra.mxu0 0.0
    %1276 = vmatprep.subr.mxu0 0.0
    %1277 = vmatpush1.msra.mxu0 0.0
    %1278 = vmatprep.subr.mxu0 0.0
    %1279 = vmatpush1.msra.mxu0 0.0
    %1280 = vmatprep.subr.mxu0 0.0
    %1281 = vmatpush1.msra.mxu0 0.0
    %1282 = vmatprep.subr.mxu0 0.0
    %1283 = vmatpush1.msra.mxu0 0.0
    %1284 = vmatprep.subr.mxu0 0.0
    %1285 = vmatpush1.msra.mxu0 0.0
    %1286 = vmatprep.subr.mxu0 0.0
    %1287 = vmatpush1.msra.mxu0 %v1251
    %1288 = vmatprep.subr.mxu0 0.0
    %1289 = vmatpush2.msra.mxu0 0.0
    %1290 = vmatprep.subr.mxu0 0.0
    %1291 = vmatpush2.msra.mxu0 0.0
    %1292 = vmatprep.subr.mxu0 0.0
    %1293 = vmatpush2.msra.mxu0 0.0
    %1294 = vmatprep.subr.mxu0 0.0
    %1295 = vmatpush2.msra.mxu0 0.0
    %1296 = vmatprep.subr.mxu0 0.0
    %1297 = vmatpush2.msra.mxu0 0.0
    %1298 = vmatprep.subr.mxu0 0.0
    %1299 = vmatpush2.msra.mxu0 0.0
    %1300 = vmatprep.subr.mxu0 0.0
    %1301 = vmatpush2.msra.mxu0 0.0
    %1302 = vmatprep.subr.mxu0 0.0
    %1303 = vmatpush2.msra.mxu0 0.0
    %1304 = vmatprep.subr.mxu0 0.0
    %1305 = vmatpush2.msra.mxu0 0.0
    %1306 = vmatprep.subr.mxu0 0.0
    %1307 = vmatpush2.msra.mxu0 0.0
    %1308 = vmatprep.subr.mxu0 0.0
    %1309 = vmatpush2.msra.mxu0 0.0
    %1310 = vmatprep.subr.mxu0 0.0
    %1311 = vmatpush2.msra.mxu0 0.0
    %1312 = vmatprep.subr.mxu0 0.0
    %1313 = vmatpush2.msra.mxu0 0.0
    %1314 = vmatprep.subr.mxu0 0.0
    %1315 = vmatpush2.msra.mxu0 0.0
    %1316 = vmatprep.subr.mxu0 0.0
    %1317 = vmatpush2.msra.mxu0 0.0
    %1318 = vmatprep.subr.mxu0 0.0
    %1319 = vmatpush2.msra.mxu0 0.0
    %1320 = vmatprep.mubr.f32.mxu0 0.0
    %1321 = vmatmul.mubr.f32.gmra.mxu0 %v1254
    %v1322 = vpop.f32.mrf.mxu0
    %v1323 = vadd.f32 0.0, %v1322
    %v1324 = vpop.f32.mrf.mxu0
    %1325 = vdwg.mxu0
    %1327 = vrot.lane.b32.xlu0 %v416, 120
    %v1328 = vpop.permute.xlu0 %1327
    %v1331 = vsel %vm419, %v1097, 0
    %1333 = vmatprep.subr.mxu0 0.0
    %1334 = vmatpush1.msra.mxu0 0.0
    %1335 = vmatprep.subr.mxu0 0.0
    %1336 = vmatpush1.msra.mxu0 0.0
    %1337 = vmatprep.subr.mxu0 0.0
    %1338 = vmatpush1.msra.mxu0 0.0
    %1339 = vmatprep.subr.mxu0 0.0
    %1340 = vmatpush1.msra.mxu0 0.0
    %1341 = vmatprep.subr.mxu0 0.0
    %1342 = vmatpush1.msra.mxu0 0.0
    %1343 = vmatprep.subr.mxu0 0.0
    %1344 = vmatpush1.msra.mxu0 0.0
    %1345 = vmatprep.subr.mxu0 0.0
    %1346 = vmatpush1.msra.mxu0 0.0
    %1347 = vmatprep.subr.mxu0 0.0
    %1348 = vmatpush1.msra.mxu0 0.0
    %1349 = vmatprep.subr.mxu0 0.0
    %1350 = vmatpush1.msra.mxu0 0.0
    %1351 = vmatprep.subr.mxu0 0.0
    %1352 = vmatpush1.msra.mxu0 0.0
    %1353 = vmatprep.subr.mxu0 0.0
    %1354 = vmatpush1.msra.mxu0 0.0
    %1355 = vmatprep.subr.mxu0 0.0
    %1356 = vmatpush1.msra.mxu0 0.0
    %1357 = vmatprep.subr.mxu0 0.0
    %1358 = vmatpush1.msra.mxu0 0.0
    %1359 = vmatprep.subr.mxu0 0.0
    %1360 = vmatpush1.msra.mxu0 0.0
    %1361 = vmatprep.subr.mxu0 0.0
    %1362 = vmatpush1.msra.mxu0 0.0
    %1363 = vmatprep.subr.mxu0 0.0
    %1364 = vmatpush1.msra.mxu0 %v1328
    %1365 = vmatprep.subr.mxu0 0.0
    %1366 = vmatpush2.msra.mxu0 0.0
    %1367 = vmatprep.subr.mxu0 0.0
    %1368 = vmatpush2.msra.mxu0 0.0
    %1369 = vmatprep.subr.mxu0 0.0
    %1370 = vmatpush2.msra.mxu0 0.0
    %1371 = vmatprep.subr.mxu0 0.0
    %1372 = vmatpush2.msra.mxu0 0.0
    %1373 = vmatprep.subr.mxu0 0.0
    %1374 = vmatpush2.msra.mxu0 0.0
    %1375 = vmatprep.subr.mxu0 0.0
    %1376 = vmatpush2.msra.mxu0 0.0
    %1377 = vmatprep.subr.mxu0 0.0
    %1378 = vmatpush2.msra.mxu0 0.0
    %1379 = vmatprep.subr.mxu0 0.0
    %1380 = vmatpush2.msra.mxu0 0.0
    %1381 = vmatprep.subr.mxu0 0.0
    %1382 = vmatpush2.msra.mxu0 0.0
    %1383 = vmatprep.subr.mxu0 0.0
    %1384 = vmatpush2.msra.mxu0 0.0
    %1385 = vmatprep.subr.mxu0 0.0
    %1386 = vmatpush2.msra.mxu0 0.0
    %1387 = vmatprep.subr.mxu0 0.0
    %1388 = vmatpush2.msra.mxu0 0.0
    %1389 = vmatprep.subr.mxu0 0.0
    %1390 = vmatpush2.msra.mxu0 0.0
    %1391 = vmatprep.subr.mxu0 0.0
    %1392 = vmatpush2.msra.mxu0 0.0
    %1393 = vmatprep.subr.mxu0 0.0
    %1394 = vmatpush2.msra.mxu0 0.0
    %1395 = vmatprep.subr.mxu0 0.0
    %1396 = vmatpush2.msra.mxu0 0.0
    %1397 = vmatprep.mubr.f32.mxu0 0.0
    %1398 = vmatmul.mubr.f32.gmra.mxu0 %v1331
    %v1399 = vpop.f32.mrf.mxu0
    %v1400 = vadd.f32 0.0, %v1399
    %v1401 = vpop.f32.mrf.mxu0
    %1402 = vdwg.mxu0
    %v1403 = vld [vmem:[#allocation13 + $0x8] sm:$0xff]
    %v1405 = vsel %vm419, %v1323, 0
    %v1408 = vsel %vm419, %v1400, 0
    %1410 = vmatprep.subr.mxu0 0.0
    %1411 = vmatpush1.msra.mxu0 0.0
    %1412 = vmatprep.subr.mxu0 0.0
    %1413 = vmatpush1.msra.mxu0 0.0
    %1414 = vmatprep.subr.mxu0 0.0
    %1415 = vmatpush1.msra.mxu0 0.0
    %1416 = vmatprep.subr.mxu0 0.0
    %1417 = vmatpush1.msra.mxu0 0.0
    %1418 = vmatprep.subr.mxu0 0.0
    %1419 = vmatpush1.msra.mxu0 0.0
    %1420 = vmatprep.subr.mxu0 0.0
    %1421 = vmatpush1.msra.mxu0 0.0
    %1422 = vmatprep.subr.mxu0 0.0
    %1423 = vmatpush1.msra.mxu0 0.0
    %1424 = vmatprep.subr.mxu0 0.0
    %1425 = vmatpush1.msra.mxu0 0.0
    %1426 = vmatprep.subr.mxu0 0.0
    %1427 = vmatpush1.msra.mxu0 0.0
    %1428 = vmatprep.subr.mxu0 0.0
    %1429 = vmatpush1.msra.mxu0 0.0
    %1430 = vmatprep.subr.mxu0 0.0
    %1431 = vmatpush1.msra.mxu0 0.0
    %1432 = vmatprep.subr.mxu0 0.0
    %1433 = vmatpush1.msra.mxu0 0.0
    %1434 = vmatprep.subr.mxu0 0.0
    %1435 = vmatpush1.msra.mxu0 0.0
    %1436 = vmatprep.subr.mxu0 0.0
    %1437 = vmatpush1.msra.mxu0 0.0
    %1438 = vmatprep.subr.mxu0 0.0
    %1439 = vmatpush1.msra.mxu0 0.0
    %1440 = vmatprep.subr.mxu0 0.0
    %1441 = vmatpush1.msra.mxu0 %v1403
    %1442 = vmatprep.subr.mxu0 0.0
    %1443 = vmatpush2.msra.mxu0 0.0
    %1444 = vmatprep.subr.mxu0 0.0
    %1445 = vmatpush2.msra.mxu0 0.0
    %1446 = vmatprep.subr.mxu0 0.0
    %1447 = vmatpush2.msra.mxu0 0.0
    %1448 = vmatprep.subr.mxu0 0.0
    %1449 = vmatpush2.msra.mxu0 0.0
    %1450 = vmatprep.subr.mxu0 0.0
    %1451 = vmatpush2.msra.mxu0 0.0
    %1452 = vmatprep.subr.mxu0 0.0
    %1453 = vmatpush2.msra.mxu0 0.0
    %1454 = vmatprep.subr.mxu0 0.0
    %1455 = vmatpush2.msra.mxu0 0.0
    %1456 = vmatprep.subr.mxu0 0.0
    %1457 = vmatpush2.msra.mxu0 0.0
    %1458 = vmatprep.subr.mxu0 0.0
    %1459 = vmatpush2.msra.mxu0 0.0
    %1460 = vmatprep.subr.mxu0 0.0
    %1461 = vmatpush2.msra.mxu0 0.0
    %1462 = vmatprep.subr.mxu0 0.0
    %1463 = vmatpush2.msra.mxu0 0.0
    %1464 = vmatprep.subr.mxu0 0.0
    %1465 = vmatpush2.msra.mxu0 0.0
    %1466 = vmatprep.subr.mxu0 0.0
    %1467 = vmatpush2.msra.mxu0 0.0
    %1468 = vmatprep.subr.mxu0 0.0
    %1469 = vmatpush2.msra.mxu0 0.0
    %1470 = vmatprep.subr.mxu0 0.0
    %1471 = vmatpush2.msra.mxu0 0.0
    %1472 = vmatprep.subr.mxu0 0.0
    %1473 = vmatpush2.msra.mxu0 0.0
    %1474 = vmatprep.mubr.f32.mxu0 0.0
    %1475 = vmatmul.mubr.f32.gmra.mxu0 %v1405
    %v1476 = vpop.f32.mrf.mxu0
    %v1477 = vadd.f32 0.0, %v1476
    %v1478 = vpop.f32.mrf.mxu0
    %1479 = vmatprep.mubr.f32.mxu0 0.0
    %1480 = vmatmul.mubr.f32.gmra.mxu0 %v1408
    %v1481 = vpop.f32.mrf.mxu0
    %v1482 = vadd.f32 0.0, %v1481
    %v1483 = vpop.f32.mrf.mxu0
    %1484 = vdwg.mxu0
    %v1486 = vsel %vm419, %v1172, 0
    %v1489 = vsel %vm419, %v1245, 0
    %1491 = vmatprep.subr.mxu0 0.0
    %1492 = vmatpush1.msra.mxu0 0.0
    %1493 = vmatprep.subr.mxu0 0.0
    %1494 = vmatpush1.msra.mxu0 0.0
    %1495 = vmatprep.subr.mxu0 0.0
    %1496 = vmatpush1.msra.mxu0 0.0
    %1497 = vmatprep.subr.mxu0 0.0
    %1498 = vmatpush1.msra.mxu0 0.0
    %1499 = vmatprep.subr.mxu0 0.0
    %1500 = vmatpush1.msra.mxu0 0.0
    %1501 = vmatprep.subr.mxu0 0.0
    %1502 = vmatpush1.msra.mxu0 0.0
    %1503 = vmatprep.subr.mxu0 0.0
    %1504 = vmatpush1.msra.mxu0 0.0
    %1505 = vmatprep.subr.mxu0 0.0
    %1506 = vmatpush1.msra.mxu0 0.0
    %1507 = vmatprep.subr.mxu0 0.0
    %1508 = vmatpush1.msra.mxu0 0.0
    %1509 = vmatprep.subr.mxu0 0.0
    %1510 = vmatpush1.msra.mxu0 0.0
    %1511 = vmatprep.subr.mxu0 0.0
    %1512 = vmatpush1.msra.mxu0 0.0
    %1513 = vmatprep.subr.mxu0 0.0
    %1514 = vmatpush1.msra.mxu0 0.0
    %1515 = vmatprep.subr.mxu0 0.0
    %1516 = vmatpush1.msra.mxu0 0.0
    %1517 = vmatprep.subr.mxu0 0.0
    %1518 = vmatpush1.msra.mxu0 0.0
    %1519 = vmatprep.subr.mxu0 0.0
    %1520 = vmatpush1.msra.mxu0 0.0
    %1521 = vmatprep.subr.mxu0 0.0
    %1522 = vmatpush1.msra.mxu0 %v1248
    %1523 = vmatprep.subr.mxu0 0.0
    %1524 = vmatpush2.msra.mxu0 0.0
    %1525 = vmatprep.subr.mxu0 0.0
    %1526 = vmatpush2.msra.mxu0 0.0
    %1527 = vmatprep.subr.mxu0 0.0
    %1528 = vmatpush2.msra.mxu0 0.0
    %1529 = vmatprep.subr.mxu0 0.0
    %1530 = vmatpush2.msra.mxu0 0.0
    %1531 = vmatprep.subr.mxu0 0.0
    %1532 = vmatpush2.msra.mxu0 0.0
    %1533 = vmatprep.subr.mxu0 0.0
    %1534 = vmatpush2.msra.mxu0 0.0
    %1535 = vmatprep.subr.mxu0 0.0
    %1536 = vmatpush2.msra.mxu0 0.0
    %1537 = vmatprep.subr.mxu0 0.0
    %1538 = vmatpush2.msra.mxu0 0.0
    %1539 = vmatprep.subr.mxu0 0.0
    %1540 = vmatpush2.msra.mxu0 0.0
    %1541 = vmatprep.subr.mxu0 0.0
    %1542 = vmatpush2.msra.mxu0 0.0
    %1543 = vmatprep.subr.mxu0 0.0
    %1544 = vmatpush2.msra.mxu0 0.0
    %1545 = vmatprep.subr.mxu0 0.0
    %1546 = vmatpush2.msra.mxu0 0.0
    %1547 = vmatprep.subr.mxu0 0.0
    %1548 = vmatpush2.msra.mxu0 0.0
    %1549 = vmatprep.subr.mxu0 0.0
    %1550 = vmatpush2.msra.mxu0 0.0
    %1551 = vmatprep.subr.mxu0 0.0
    %1552 = vmatpush2.msra.mxu0 0.0
    %1553 = vmatprep.subr.mxu0 0.0
    %1554 = vmatpush2.msra.mxu0 0.0
    %1555 = vmatprep.mubr.f32.mxu0 0.0
    %1556 = vmatmul.mubr.f32.gmra.mxu0 %v1486
    %v1557 = vpop.f32.mrf.mxu0
    %v1558 = vadd.f32 %v1477, %v1557
    %v1559 = vpop.f32.mrf.mxu0
    %1560 = vmatprep.mubr.f32.mxu0 0.0
    %1561 = vmatmul.mubr.f32.gmra.mxu0 %v1489
    %v1562 = vpop.f32.mrf.mxu0
    %v1563 = vadd.f32 %v1482, %v1562
    %v1564 = vpop.f32.mrf.mxu0
    %1565 = vdwg.mxu0
    %1566 = vrot.lane.b32.xlu0 %v411, 112
    %v1567 = vpop.permute.xlu0 %1566
    %v1570 = vsel %vm419, %v1098, 0
    %1572 = vmatprep.subr.mxu0 0.0
    %1573 = vmatpush1.msra.mxu0 0.0
    %1574 = vmatprep.subr.mxu0 0.0
    %1575 = vmatpush1.msra.mxu0 0.0
    %1576 = vmatprep.subr.mxu0 0.0
    %1577 = vmatpush1.msra.mxu0 0.0
    %1578 = vmatprep.subr.mxu0 0.0
    %1579 = vmatpush1.msra.mxu0 0.0
    %1580 = vmatprep.subr.mxu0 0.0
    %1581 = vmatpush1.msra.mxu0 0.0
    %1582 = vmatprep.subr.mxu0 0.0
    %1583 = vmatpush1.msra.mxu0 0.0
    %1584 = vmatprep.subr.mxu0 0.0
    %1585 = vmatpush1.msra.mxu0 0.0
    %1586 = vmatprep.subr.mxu0 0.0
    %1587 = vmatpush1.msra.mxu0 0.0
    %1588 = vmatprep.subr.mxu0 0.0
    %1589 = vmatpush1.msra.mxu0 0.0
    %1590 = vmatprep.subr.mxu0 0.0
    %1591 = vmatpush1.msra.mxu0 0.0
    %1592 = vmatprep.subr.mxu0 0.0
    %1593 = vmatpush1.msra.mxu0 0.0
    %1594 = vmatprep.subr.mxu0 0.0
    %1595 = vmatpush1.msra.mxu0 0.0
    %1596 = vmatprep.subr.mxu0 0.0
    %1597 = vmatpush1.msra.mxu0 0.0
    %1598 = vmatprep.subr.mxu0 0.0
    %1599 = vmatpush1.msra.mxu0 0.0
    %1600 = vmatprep.subr.mxu0 0.0
    %1601 = vmatpush1.msra.mxu0 0.0
    %1602 = vmatprep.subr.mxu0 0.0
    %1603 = vmatpush1.msra.mxu0 %v1567
    %1604 = vmatprep.subr.mxu0 0.0
    %1605 = vmatpush2.msra.mxu0 0.0
    %1606 = vmatprep.subr.mxu0 0.0
    %1607 = vmatpush2.msra.mxu0 0.0
    %1608 = vmatprep.subr.mxu0 0.0
    %1609 = vmatpush2.msra.mxu0 0.0
    %1610 = vmatprep.subr.mxu0 0.0
    %1611 = vmatpush2.msra.mxu0 0.0
    %1612 = vmatprep.subr.mxu0 0.0
    %1613 = vmatpush2.msra.mxu0 0.0
    %1614 = vmatprep.subr.mxu0 0.0
    %1615 = vmatpush2.msra.mxu0 0.0
    %1616 = vmatprep.subr.mxu0 0.0
    %1617 = vmatpush2.msra.mxu0 0.0
    %1618 = vmatprep.subr.mxu0 0.0
    %1619 = vmatpush2.msra.mxu0 0.0
    %1620 = vmatprep.subr.mxu0 0.0
    %1621 = vmatpush2.msra.mxu0 0.0
    %1622 = vmatprep.subr.mxu0 0.0
    %1623 = vmatpush2.msra.mxu0 0.0
    %1624 = vmatprep.subr.mxu0 0.0
    %1625 = vmatpush2.msra.mxu0 0.0
    %1626 = vmatprep.subr.mxu0 0.0
    %1627 = vmatpush2.msra.mxu0 0.0
    %1628 = vmatprep.subr.mxu0 0.0
    %1629 = vmatpush2.msra.mxu0 0.0
    %1630 = vmatprep.subr.mxu0 0.0
    %1631 = vmatpush2.msra.mxu0 0.0
    %1632 = vmatprep.subr.mxu0 0.0
    %1633 = vmatpush2.msra.mxu0 0.0
    %1634 = vmatprep.subr.mxu0 0.0
    %1635 = vmatpush2.msra.mxu0 0.0
    %1636 = vmatprep.mubr.f32.mxu0 0.0
    %1637 = vmatmul.mubr.f32.gmra.mxu0 %v1570
    %v1638 = vpop.f32.mrf.mxu0
    %v1639 = vadd.f32 0.0, %v1638
    %v1640 = vpop.f32.mrf.mxu0
    %1641 = vdwg.mxu0
    %1642 = vrot.lane.b32.xlu0 %v416, 112
    %v1643 = vpop.permute.xlu0 %1642
    %v1646 = vsel %vm419, %v1099, 0
    %1648 = vmatprep.subr.mxu0 0.0
    %1649 = vmatpush1.msra.mxu0 0.0
    %1650 = vmatprep.subr.mxu0 0.0
    %1651 = vmatpush1.msra.mxu0 0.0
    %1652 = vmatprep.subr.mxu0 0.0
    %1653 = vmatpush1.msra.mxu0 0.0
    %1654 = vmatprep.subr.mxu0 0.0
    %1655 = vmatpush1.msra.mxu0 0.0
    %1656 = vmatprep.subr.mxu0 0.0
    %1657 = vmatpush1.msra.mxu0 0.0
    %1658 = vmatprep.subr.mxu0 0.0
    %1659 = vmatpush1.msra.mxu0 0.0
    %1660 = vmatprep.subr.mxu0 0.0
    %1661 = vmatpush1.msra.mxu0 0.0
    %1662 = vmatprep.subr.mxu0 0.0
    %1663 = vmatpush1.msra.mxu0 0.0
    %1664 = vmatprep.subr.mxu0 0.0
    %1665 = vmatpush1.msra.mxu0 0.0
    %1666 = vmatprep.subr.mxu0 0.0
    %1667 = vmatpush1.msra.mxu0 0.0
    %1668 = vmatprep.subr.mxu0 0.0
    %1669 = vmatpush1.msra.mxu0 0.0
    %1670 = vmatprep.subr.mxu0 0.0
    %1671 = vmatpush1.msra.mxu0 0.0
    %1672 = vmatprep.subr.mxu0 0.0
    %1673 = vmatpush1.msra.mxu0 0.0
    %1674 = vmatprep.subr.mxu0 0.0
    %1675 = vmatpush1.msra.mxu0 0.0
    %1676 = vmatprep.subr.mxu0 0.0
    %1677 = vmatpush1.msra.mxu0 0.0
    %1678 = vmatprep.subr.mxu0 0.0
    %1679 = vmatpush1.msra.mxu0 %v1643
    %1680 = vmatprep.subr.mxu0 0.0
    %1681 = vmatpush2.msra.mxu0 0.0
    %1682 = vmatprep.subr.mxu0 0.0
    %1683 = vmatpush2.msra.mxu0 0.0
    %1684 = vmatprep.subr.mxu0 0.0
    %1685 = vmatpush2.msra.mxu0 0.0
    %1686 = vmatprep.subr.mxu0 0.0
    %1687 = vmatpush2.msra.mxu0 0.0
    %1688 = vmatprep.subr.mxu0 0.0
    %1689 = vmatpush2.msra.mxu0 0.0
    %1690 = vmatprep.subr.mxu0 0.0
    %1691 = vmatpush2.msra.mxu0 0.0
    %1692 = vmatprep.subr.mxu0 0.0
    %1693 = vmatpush2.msra.mxu0 0.0
    %1694 = vmatprep.subr.mxu0 0.0
    %1695 = vmatpush2.msra.mxu0 0.0
    %1696 = vmatprep.subr.mxu0 0.0
    %1697 = vmatpush2.msra.mxu0 0.0
    %1698 = vmatprep.subr.mxu0 0.0
    %1699 = vmatpush2.msra.mxu0 0.0
    %1700 = vmatprep.subr.mxu0 0.0
    %1701 = vmatpush2.msra.mxu0 0.0
    %1702 = vmatprep.subr.mxu0 0.0
    %1703 = vmatpush2.msra.mxu0 0.0
    %1704 = vmatprep.subr.mxu0 0.0
    %1705 = vmatpush2.msra.mxu0 0.0
    %1706 = vmatprep.subr.mxu0 0.0
    %1707 = vmatpush2.msra.mxu0 0.0
    %1708 = vmatprep.subr.mxu0 0.0
    %1709 = vmatpush2.msra.mxu0 0.0
    %1710 = vmatprep.subr.mxu0 0.0
    %1711 = vmatpush2.msra.mxu0 0.0
    %1712 = vmatprep.mubr.f32.mxu0 0.0
    %1713 = vmatmul.mubr.f32.gmra.mxu0 %v1646
    %v1714 = vpop.f32.mrf.mxu0
    %v1715 = vadd.f32 0.0, %v1714
    %v1716 = vpop.f32.mrf.mxu0
    %1717 = vdwg.mxu0
    %v1718 = vld [vmem:[#allocation13 + $0x10] sm:$0xff]
    %v1720 = vsel %vm419, %v1639, 0
    %v1723 = vsel %vm419, %v1715, 0
    %1725 = vmatprep.subr.mxu0 0.0
    %1726 = vmatpush1.msra.mxu0 0.0
    %1727 = vmatprep.subr.mxu0 0.0
    %1728 = vmatpush1.msra.mxu0 0.0
    %1729 = vmatprep.subr.mxu0 0.0
    %1730 = vmatpush1.msra.mxu0 0.0
    %1731 = vmatprep.subr.mxu0 0.0
    %1732 = vmatpush1.msra.mxu0 0.0
    %1733 = vmatprep.subr.mxu0 0.0
    %1734 = vmatpush1.msra.mxu0 0.0
    %1735 = vmatprep.subr.mxu0 0.0
    %1736 = vmatpush1.msra.mxu0 0.0
    %1737 = vmatprep.subr.mxu0 0.0
    %1738 = vmatpush1.msra.mxu0 0.0
    %1739 = vmatprep.subr.mxu0 0.0
    %1740 = vmatpush1.msra.mxu0 0.0
    %1741 = vmatprep.subr.mxu0 0.0
    %1742 = vmatpush1.msra.mxu0 0.0
    %1743 = vmatprep.subr.mxu0 0.0
    %1744 = vmatpush1.msra.mxu0 0.0
    %1745 = vmatprep.subr.mxu0 0.0
    %1746 = vmatpush1.msra.mxu0 0.0
    %1747 = vmatprep.subr.mxu0 0.0
    %1748 = vmatpush1.msra.mxu0 0.0
    %1749 = vmatprep.subr.mxu0 0.0
    %1750 = vmatpush1.msra.mxu0 0.0
    %1751 = vmatprep.subr.mxu0 0.0
    %1752 = vmatpush1.msra.mxu0 0.0
    %1753 = vmatprep.subr.mxu0 0.0
    %1754 = vmatpush1.msra.mxu0 0.0
    %1755 = vmatprep.subr.mxu0 0.0
    %1756 = vmatpush1.msra.mxu0 %v1718
    %1757 = vmatprep.subr.mxu0 0.0
    %1758 = vmatpush2.msra.mxu0 0.0
    %1759 = vmatprep.subr.mxu0 0.0
    %1760 = vmatpush2.msra.mxu0 0.0
    %1761 = vmatprep.subr.mxu0 0.0
    %1762 = vmatpush2.msra.mxu0 0.0
    %1763 = vmatprep.subr.mxu0 0.0
    %1764 = vmatpush2.msra.mxu0 0.0
    %1765 = vmatprep.subr.mxu0 0.0
    %1766 = vmatpush2.msra.mxu0 0.0
    %1767 = vmatprep.subr.mxu0 0.0
    %1768 = vmatpush2.msra.mxu0 0.0
    %1769 = vmatprep.subr.mxu0 0.0
    %1770 = vmatpush2.msra.mxu0 0.0
    %1771 = vmatprep.subr.mxu0 0.0
    %1772 = vmatpush2.msra.mxu0 0.0
    %1773 = vmatprep.subr.mxu0 0.0
    %1774 = vmatpush2.msra.mxu0 0.0
    %1775 = vmatprep.subr.mxu0 0.0
    %1776 = vmatpush2.msra.mxu0 0.0
    %1777 = vmatprep.subr.mxu0 0.0
    %1778 = vmatpush2.msra.mxu0 0.0
    %1779 = vmatprep.subr.mxu0 0.0
    %1780 = vmatpush2.msra.mxu0 0.0
    %1781 = vmatprep.subr.mxu0 0.0
    %1782 = vmatpush2.msra.mxu0 0.0
    %1783 = vmatprep.subr.mxu0 0.0
    %1784 = vmatpush2.msra.mxu0 0.0
    %1785 = vmatprep.subr.mxu0 0.0
    %1786 = vmatpush2.msra.mxu0 0.0
    %1787 = vmatprep.subr.mxu0 0.0
    %1788 = vmatpush2.msra.mxu0 0.0
    %1789 = vmatprep.mubr.f32.mxu0 0.0
    %1790 = vmatmul.mubr.f32.gmra.mxu0 %v1720
    %v1791 = vpop.f32.mrf.mxu0
    %v1792 = vadd.f32 0.0, %v1791
    %v1793 = vpop.f32.mrf.mxu0
    %1794 = vmatprep.mubr.f32.mxu0 0.0
    %1795 = vmatmul.mubr.f32.gmra.mxu0 %v1723
    %v1796 = vpop.f32.mrf.mxu0
    %v1797 = vadd.f32 0.0, %v1796
    %v1798 = vpop.f32.mrf.mxu0
    %1799 = vdwg.mxu0
    %v1800 = vadd.f32 %v1558, %v1792
    %v1801 = vadd.f32 %v1563, %v1797
    %1802 = vrot.lane.b32.xlu0 %v411, 104
    %v1803 = vpop.permute.xlu0 %1802
    %v1806 = vsel %vm419, %v1100, 0
    %1808 = vmatprep.subr.mxu0 0.0
    %1809 = vmatpush1.msra.mxu0 0.0
    %1810 = vmatprep.subr.mxu0 0.0
    %1811 = vmatpush1.msra.mxu0 0.0
    %1812 = vmatprep.subr.mxu0 0.0
    %1813 = vmatpush1.msra.mxu0 0.0
    %1814 = vmatprep.subr.mxu0 0.0
    %1815 = vmatpush1.msra.mxu0 0.0
    %1816 = vmatprep.subr.mxu0 0.0
    %1817 = vmatpush1.msra.mxu0 0.0
    %1818 = vmatprep.subr.mxu0 0.0
    %1819 = vmatpush1.msra.mxu0 0.0
    %1820 = vmatprep.subr.mxu0 0.0
    %1821 = vmatpush1.msra.mxu0 0.0
    %1822 = vmatprep.subr.mxu0 0.0
    %1823 = vmatpush1.msra.mxu0 0.0
    %1824 = vmatprep.subr.mxu0 0.0
    %1825 = vmatpush1.msra.mxu0 0.0
    %1826 = vmatprep.subr.mxu0 0.0
    %1827 = vmatpush1.msra.mxu0 0.0
    %1828 = vmatprep.subr.mxu0 0.0
    %1829 = vmatpush1.msra.mxu0 0.0
    %1830 = vmatprep.subr.mxu0 0.0
    %1831 = vmatpush1.msra.mxu0 0.0
    %1832 = vmatprep.subr.mxu0 0.0
    %1833 = vmatpush1.msra.mxu0 0.0
    %1834 = vmatprep.subr.mxu0 0.0
    %1835 = vmatpush1.msra.mxu0 0.0
    %1836 = vmatprep.subr.mxu0 0.0
    %1837 = vmatpush1.msra.mxu0 0.0
    %1838 = vmatprep.subr.mxu0 0.0
    %1839 = vmatpush1.msra.mxu0 %v1803
    %1840 = vmatprep.subr.mxu0 0.0
    %1841 = vmatpush2.msra.mxu0 0.0
    %1842 = vmatprep.subr.mxu0 0.0
    %1843 = vmatpush2.msra.mxu0 0.0
    %1844 = vmatprep.subr.mxu0 0.0
    %1845 = vmatpush2.msra.mxu0 0.0
    %1846 = vmatprep.subr.mxu0 0.0
    %1847 = vmatpush2.msra.mxu0 0.0
    %1848 = vmatprep.subr.mxu0 0.0
    %1849 = vmatpush2.msra.mxu0 0.0
    %1850 = vmatprep.subr.mxu0 0.0
    %1851 = vmatpush2.msra.mxu0 0.0
    %1852 = vmatprep.subr.mxu0 0.0
    %1853 = vmatpush2.msra.mxu0 0.0
    %1854 = vmatprep.subr.mxu0 0.0
    %1855 = vmatpush2.msra.mxu0 0.0
    %1856 = vmatprep.subr.mxu0 0.0
    %1857 = vmatpush2.msra.mxu0 0.0
    %1858 = vmatprep.subr.mxu0 0.0
    %1859 = vmatpush2.msra.mxu0 0.0
    %1860 = vmatprep.subr.mxu0 0.0
    %1861 = vmatpush2.msra.mxu0 0.0
    %1862 = vmatprep.subr.mxu0 0.0
    %1863 = vmatpush2.msra.mxu0 0.0
    %1864 = vmatprep.subr.mxu0 0.0
    %1865 = vmatpush2.msra.mxu0 0.0
    %1866 = vmatprep.subr.mxu0 0.0
    %1867 = vmatpush2.msra.mxu0 0.0
    %1868 = vmatprep.subr.mxu0 0.0
    %1869 = vmatpush2.msra.mxu0 0.0
    %1870 = vmatprep.subr.mxu0 0.0
    %1871 = vmatpush2.msra.mxu0 0.0
    %1872 = vmatprep.mubr.f32.mxu0 0.0
    %1873 = vmatmul.mubr.f32.gmra.mxu0 %v1806
    %v1874 = vpop.f32.mrf.mxu0
    %v1875 = vadd.f32 0.0, %v1874
    %v1876 = vpop.f32.mrf.mxu0
    %1877 = vdwg.mxu0
    %1878 = vrot.lane.b32.xlu0 %v416, 104
    %v1879 = vpop.permute.xlu0 %1878
    %v1882 = vsel %vm419, %v1101, 0
    %1884 = vmatprep.subr.mxu0 0.0
    %1885 = vmatpush1.msra.mxu0 0.0
    %1886 = vmatprep.subr.mxu0 0.0
    %1887 = vmatpush1.msra.mxu0 0.0
    %1888 = vmatprep.subr.mxu0 0.0
    %1889 = vmatpush1.msra.mxu0 0.0
    %1890 = vmatprep.subr.mxu0 0.0
    %1891 = vmatpush1.msra.mxu0 0.0
    %1892 = vmatprep.subr.mxu0 0.0
    %1893 = vmatpush1.msra.mxu0 0.0
    %1894 = vmatprep.subr.mxu0 0.0
    %1895 = vmatpush1.msra.mxu0 0.0
    %1896 = vmatprep.subr.mxu0 0.0
    %1897 = vmatpush1.msra.mxu0 0.0
    %1898 = vmatprep.subr.mxu0 0.0
    %1899 = vmatpush1.msra.mxu0 0.0
    %1900 = vmatprep.subr.mxu0 0.0
    %1901 = vmatpush1.msra.mxu0 0.0
    %1902 = vmatprep.subr.mxu0 0.0
    %1903 = vmatpush1.msra.mxu0 0.0
    %1904 = vmatprep.subr.mxu0 0.0
    %1905 = vmatpush1.msra.mxu0 0.0
    %1906 = vmatprep.subr.mxu0 0.0
    %1907 = vmatpush1.msra.mxu0 0.0
    %1908 = vmatprep.subr.mxu0 0.0
    %1909 = vmatpush1.msra.mxu0 0.0
    %1910 = vmatprep.subr.mxu0 0.0
    %1911 = vmatpush1.msra.mxu0 0.0
    %1912 = vmatprep.subr.mxu0 0.0
    %1913 = vmatpush1.msra.mxu0 0.0
    %1914 = vmatprep.subr.mxu0 0.0
    %1915 = vmatpush1.msra.mxu0 %v1879
    %1916 = vmatprep.subr.mxu0 0.0
    %1917 = vmatpush2.msra.mxu0 0.0
    %1918 = vmatprep.subr.mxu0 0.0
    %1919 = vmatpush2.msra.mxu0 0.0
    %1920 = vmatprep.subr.mxu0 0.0
    %1921 = vmatpush2.msra.mxu0 0.0
    %1922 = vmatprep.subr.mxu0 0.0
    %1923 = vmatpush2.msra.mxu0 0.0
    %1924 = vmatprep.subr.mxu0 0.0
    %1925 = vmatpush2.msra.mxu0 0.0
    %1926 = vmatprep.subr.mxu0 0.0
    %1927 = vmatpush2.msra.mxu0 0.0
    %1928 = vmatprep.subr.mxu0 0.0
    %1929 = vmatpush2.msra.mxu0 0.0
    %1930 = vmatprep.subr.mxu0 0.0
    %1931 = vmatpush2.msra.mxu0 0.0
    %1932 = vmatprep.subr.mxu0 0.0
    %1933 = vmatpush2.msra.mxu0 0.0
    %1934 = vmatprep.subr.mxu0 0.0
    %1935 = vmatpush2.msra.mxu0 0.0
    %1936 = vmatprep.subr.mxu0 0.0
    %1937 = vmatpush2.msra.mxu0 0.0
    %1938 = vmatprep.subr.mxu0 0.0
    %1939 = vmatpush2.msra.mxu0 0.0
    %1940 = vmatprep.subr.mxu0 0.0
    %1941 = vmatpush2.msra.mxu0 0.0
    %1942 = vmatprep.subr.mxu0 0.0
    %1943 = vmatpush2.msra.mxu0 0.0
    %1944 = vmatprep.subr.mxu0 0.0
    %1945 = vmatpush2.msra.mxu0 0.0
    %1946 = vmatprep.subr.mxu0 0.0
    %1947 = vmatpush2.msra.mxu0 0.0
    %1948 = vmatprep.mubr.f32.mxu0 0.0
    %1949 = vmatmul.mubr.f32.gmra.mxu0 %v1882
    %v1950 = vpop.f32.mrf.mxu0
    %v1951 = vadd.f32 0.0, %v1950
    %v1952 = vpop.f32.mrf.mxu0
    %1953 = vdwg.mxu0
    %v1954 = vld [vmem:[#allocation13 + $0x18] sm:$0xff]
    %v1956 = vsel %vm419, %v1875, 0
    %v1959 = vsel %vm419, %v1951, 0
    %1961 = vmatprep.subr.mxu0 0.0
    %1962 = vmatpush1.msra.mxu0 0.0
    %1963 = vmatprep.subr.mxu0 0.0
    %1964 = vmatpush1.msra.mxu0 0.0
    %1965 = vmatprep.subr.mxu0 0.0
    %1966 = vmatpush1.msra.mxu0 0.0
    %1967 = vmatprep.subr.mxu0 0.0
    %1968 = vmatpush1.msra.mxu0 0.0
    %1969 = vmatprep.subr.mxu0 0.0
    %1970 = vmatpush1.msra.mxu0 0.0
    %1971 = vmatprep.subr.mxu0 0.0
    %1972 = vmatpush1.msra.mxu0 0.0
    %1973 = vmatprep.subr.mxu0 0.0
    %1974 = vmatpush1.msra.mxu0 0.0
    %1975 = vmatprep.subr.mxu0 0.0
    %1976 = vmatpush1.msra.mxu0 0.0
    %1977 = vmatprep.subr.mxu0 0.0
    %1978 = vmatpush1.msra.mxu0 0.0
    %1979 = vmatprep.subr.mxu0 0.0
    %1980 = vmatpush1.msra.mxu0 0.0
    %1981 = vmatprep.subr.mxu0 0.0
    %1982 = vmatpush1.msra.mxu0 0.0
    %1983 = vmatprep.subr.mxu0 0.0
    %1984 = vmatpush1.msra.mxu0 0.0
    %1985 = vmatprep.subr.mxu0 0.0
    %1986 = vmatpush1.msra.mxu0 0.0
    %1987 = vmatprep.subr.mxu0 0.0
    %1988 = vmatpush1.msra.mxu0 0.0
    %1989 = vmatprep.subr.mxu0 0.0
    %1990 = vmatpush1.msra.mxu0 0.0
    %1991 = vmatprep.subr.mxu0 0.0
    %1992 = vmatpush1.msra.mxu0 %v1954
    %1993 = vmatprep.subr.mxu0 0.0
    %1994 = vmatpush2.msra.mxu0 0.0
    %1995 = vmatprep.subr.mxu0 0.0
    %1996 = vmatpush2.msra.mxu0 0.0
    %1997 = vmatprep.subr.mxu0 0.0
    %1998 = vmatpush2.msra.mxu0 0.0
    %1999 = vmatprep.subr.mxu0 0.0
    %2000 = vmatpush2.msra.mxu0 0.0
    %2001 = vmatprep.subr.mxu0 0.0
    %2002 = vmatpush2.msra.mxu0 0.0
    %2003 = vmatprep.subr.mxu0 0.0
    %2004 = vmatpush2.msra.mxu0 0.0
    %2005 = vmatprep.subr.mxu0 0.0
    %2006 = vmatpush2.msra.mxu0 0.0
    %2007 = vmatprep.subr.mxu0 0.0
    %2008 = vmatpush2.msra.mxu0 0.0
    %2009 = vmatprep.subr.mxu0 0.0
    %2010 = vmatpush2.msra.mxu0 0.0
    %2011 = vmatprep.subr.mxu0 0.0
    %2012 = vmatpush2.msra.mxu0 0.0
    %2013 = vmatprep.subr.mxu0 0.0
    %2014 = vmatpush2.msra.mxu0 0.0
    %2015 = vmatprep.subr.mxu0 0.0
    %2016 = vmatpush2.msra.mxu0 0.0
    %2017 = vmatprep.subr.mxu0 0.0
    %2018 = vmatpush2.msra.mxu0 0.0
    %2019 = vmatprep.subr.mxu0 0.0
    %2020 = vmatpush2.msra.mxu0 0.0
    %2021 = vmatprep.subr.mxu0 0.0
    %2022 = vmatpush2.msra.mxu0 0.0
    %2023 = vmatprep.subr.mxu0 0.0
    %2024 = vmatpush2.msra.mxu0 0.0
    %2025 = vmatprep.mubr.f32.mxu0 0.0
    %2026 = vmatmul.mubr.f32.gmra.mxu0 %v1956
    %v2027 = vpop.f32.mrf.mxu0
    %v2028 = vadd.f32 0.0, %v2027
    %v2029 = vpop.f32.mrf.mxu0
    %2030 = vmatprep.mubr.f32.mxu0 0.0
    %2031 = vmatmul.mubr.f32.gmra.mxu0 %v1959
    %v2032 = vpop.f32.mrf.mxu0
    %v2033 = vadd.f32 0.0, %v2032
    %v2034 = vpop.f32.mrf.mxu0
    %2035 = vdwg.mxu0
    %v2036 = vadd.f32 %v1800, %v2028
    %v2037 = vadd.f32 %v1801, %v2033
    %v2038 = vld [vmem:[%s10] sm:$0x1]
    %v2040 = vlaneseq
    %v2041 = vshrl.u32 %v2040, 7
    %v2042 = vsub.s32 0, %v2041
    %v2043 = vrot.slane %v2038, %v2042
    %v2045 = vadd.f32 %v2036, %v2043
    %v2046 = vadd.f32 %v2037, %v2043
    %2047 = vst.msk [vmem:[#allocation14] sm:$0xff] %vm151, %v2045
    %2048 = vst.msk [vmem:[#allocation14 + $0x8] sm:$0xff] %vm151, %v2046
    // Predicated region
    $region74: #{tpu_custom_call.1} parent=1 // pred_check
      _
    $region75: #{tpu_custom_call.1} parent=1 // pred_check_branch
      %2050 = sbr.rel (0) target = $region77
    $region76: #{tpu_custom_call.1} parent=1 // pred_region
      %s2052 = ssub.s32 256, 256
      %2053 = vsyncadd [#allocation4], %s2052
      %s2054 = sshll.u32 [#allocation14], 4
      %s2055 = int_to_ptr.vmem [resolvable:$true] %s2054
      %2060 = dma.vmem_to_hbm [thread:$0]  %s2055, 256, %s11, [#allocation4], 128, 128, 8
    $region77: #{tpu_custom_call.1} parent=1 // pred_fallthru
      _
    // Predicated region
    $region78: #{tpu_custom_call.1} parent=1 // pred_check
      _
    $region79: #{tpu_custom_call.1} parent=1 // pred_check_branch
      %2062 = sbr.rel (0) target = $region81
    $region80: #{tpu_custom_call.1} parent=1 // pred_region
      %2063 = dma.done [#allocation4], 256
    $region81: #{tpu_custom_call.1} parent=1 // pred_fallthru
      _
    %2064 = vsyncpa [#allocation3], 1
    %2065 = vsyncpa [#allocation6], 1
    %2066 = vsyncpa [#allocation9], 1
    %2067 = vsyncpa [#allocation12], 1
    %2068 = vsyncpa [#allocation4], 1

</llo_original>
